<compile_context>
chip_gen: v6e
topology: v6e:2x2x1
jax: 0.10.0
libtpu: 0.0.40
codegen_flags: <defaults>
</compile_context>

<pallas_src>
import functools

import jax
import jax.numpy as jnp
from jax.experimental import pallas as pl
from jax.experimental.pallas import tpu as pltpu

LANE = 128


def _round_up(x, m):
    return (x + m - 1) // m * m


# --------------------------------------------------------------------------
# Fused kernel: all conv layers + FC head + softmax for one batch element.
# --------------------------------------------------------------------------
def _fused_kernel(*refs, nlayers, kt, pt, nclasses, need_activations):
    """Ref order: x0, (w_l, b_l)*nlayers, wfc, bfc | score, prob, (act_l)* |
    halo scratch per intermediate layer.

      x0   : [1, T+2*pt, S*Cin0]   f32, time-halo'd input, lane = s*Cin0 + c
      w_l  : [kt, S*Cin_l, S*Cout_l]  bf16 block-banded (spatial taps folded)
      b_l  : [1, S*Cout_l]         f32 (bias tiled over lanes)
      wfc  : [S*Cout_last, N_pad]  bf16
      bfc  : [1, N_pad]            f32
      score/prob : [1, T, N_pad]   f32
      act_l      : [1, T, S*Cout_l] f32 (optional)
      scratch_l  : [T+2*pt, S*Cout_l] f32 VMEM (halo'd inter-layer activation)
    """
    n_in = 1 + 2 * nlayers + 2
    n_out = 2 + (nlayers if need_activations else 0)
    in_refs = refs[:n_in]
    out_refs = refs[n_in:n_in + n_out]
    scratch_refs = refs[n_in + n_out:]

    x0_ref = in_refs[0]
    wfc_ref, bfc_ref = in_refs[n_in - 2], in_refs[n_in - 1]
    score_ref, prob_ref = out_refs[0], out_refs[1]
    act_refs = out_refs[2:]

    t_dim = score_ref.shape[1]
    n_pad = score_ref.shape[-1]
    mx_dtype = wfc_ref.dtype          # matmul operand dtype (bf16)

    y = None
    for l in range(nlayers):
        w_ref = in_refs[1 + 2 * l]
        b_ref = in_refs[2 + 2 * l]
        l_out = w_ref.shape[2]
        acc = jnp.zeros((t_dim, l_out), jnp.float32)
        for dt in range(kt):          # time taps: static sublane-offset views
            if l == 0:
                a = x0_ref[0, dt:dt + t_dim, :]
            else:
                a = scratch_refs[l - 1][dt:dt + t_dim, :]
            acc = acc + jnp.dot(a.astype(mx_dtype), w_ref[dt],
                                preferred_element_type=jnp.float32)
        y = jnp.maximum(acc + b_ref[...], 0.0)      # fused bias + ReLU (f32)
        if need_activations:
            act_refs[l][0] = y
        if l + 1 < nlayers:                         # stash for next layer
            h = scratch_refs[l]
            h[pt:pt + t_dim, :] = y
            if pt > 0:                              # zero the time-halo rows
                zeros = jnp.zeros((pt, l_out), h.dtype)
                h[0:pt, :] = zeros
                h[pt + t_dim:pt + t_dim + pt, :] = zeros

    # Per-time-step FC head: one dense-K matmul, then masked exact softmax.
    score = jnp.dot(y.astype(mx_dtype), wfc_ref[...],
                    preferred_element_type=jnp.float32) + bfc_ref[...]
    score_ref[0] = score
    lane = jax.lax.broadcasted_iota(jnp.int32, (t_dim, n_pad), 1)
    logits = jnp.where(lane < nclasses, score, jnp.float32(-1e30))
    m = jnp.max(logits, axis=-1, keepdims=True)
    e = jnp.exp(logits - m)
    prob_ref[0] = e / jnp.sum(e, axis=-1, keepdims=True)


# --------------------------------------------------------------------------
# Weight packing helpers (wrapper-side, tiny, run once per call).
# --------------------------------------------------------------------------
def _spatial_scatter(s_dim, ks):
    """scatter[ds, sp, s] = 1 iff sp == s + ds - (ks-1)//2.

    Folds the spatial taps and the spatial zero padding of a stride-1 'same'
    conv into a block-banded [S*Cin, S*Cout] matrix (via einsum below)."""
    ps = (ks - 1) // 2
    sp = jnp.arange(s_dim)[None, :, None]
    s = jnp.arange(s_dim)[None, None, :]
    ds = jnp.arange(ks)[:, None, None]
    return (sp == s + ds - ps).astype(jnp.float32)


# --------------------------------------------------------------------------
# Full forward pass (matches SpatiotemporalNetworkCausal.forward).
# --------------------------------------------------------------------------
def spatiotemporal_causal_forward(x_nchw, conv_weights, conv_biases,
                                  fc_weight, fc_bias, *,
                                  s_kernelsize, t_kernelsize, nclasses,
                                  matmul_dtype=jnp.bfloat16,
                                  need_activations=False):
    """x_nchw: [B, C_in, S, T]; conv_weights[i]: [C_out, C_in, ks, kt] (torch
    layout); conv_biases[i]: [C_out]; fc_weight: [nclasses, C_out_last*S]
    (torch Linear layout, feature index = c*S + s); fc_bias: [nclasses].

    Returns (score [B, T, nclasses], probs [B, T, nclasses], net dict).
    """
    ks, kt = s_kernelsize, t_kernelsize
    assert ks % 2 == 1 and kt % 2 == 1, "stride-1 'same' conv assumed"
    ps, pt = (ks - 1) // 2, (kt - 1) // 2
    del ps  # folded into the scattered weights

    B, c0, s_dim, t_dim = x_nchw.shape

    # NCHW -> [B, T, S*C] once (lane index = s*C + c) + a tiny zero time halo.
    x = jnp.transpose(x_nchw.astype(jnp.float32), (0, 3, 2, 1))
    x = x.reshape(B, t_dim, s_dim * c0)
    x0 = jnp.pad(x, ((0, 0), (pt, pt), (0, 0)))

    # Block-banded weights: W_dt[sp*Ci + ci, s*Co + co] = w[co, ci, ds, dt]
    # where sp = s + ds - (ks-1)//2 (out-of-range sp dropped == zero padding).
    scat = _spatial_scatter(s_dim, ks)
    conv_w_packed, conv_b_packed, cins, couts = [], [], [], []
    cin = c0
    for w_t, b_t in zip(conv_weights, conv_biases):
        cout = w_t.shape[0]
        wt = jnp.transpose(w_t.astype(jnp.float32), (2, 3, 1, 0))  # [ks,kt,Ci,Co]
        wl = jnp.einsum('kpq,ktio->tpiqo', scat, wt)               # [kt,S,Ci,S,Co]
        conv_w_packed.append(
            wl.reshape(kt, s_dim * cin, s_dim * cout).astype(matmul_dtype))
        conv_b_packed.append(jnp.tile(b_t.astype(jnp.float32), s_dim)[None, :])
        cins.append(cin)
        couts.append(cout)
        cin = cout

    nlayers = len(conv_weights)
    c_last = couts[-1]
    n_pad = _round_up(nclasses, LANE)

    # torch fc weight [nclasses, C*S] (feature c*S + s) -> [S*C, N_pad] to
    # match the kernel's s*C + c lane order.
    wfc = fc_weight.astype(jnp.float32).reshape(nclasses, c_last, s_dim)
    wfc = jnp.transpose(wfc, (2, 1, 0)).reshape(s_dim * c_last, nclasses)
    wfc = jnp.pad(wfc, ((0, 0), (0, n_pad - nclasses))).astype(matmul_dtype)
    bfc = jnp.pad(fc_bias.astype(jnp.float32), (0, n_pad - nclasses))[None, :]

    kernel = functools.partial(_fused_kernel, nlayers=nlayers, kt=kt, pt=pt,
                               nclasses=nclasses,
                               need_activations=need_activations)

    in_specs = [pl.BlockSpec((1, t_dim + 2 * pt, s_dim * c0),
                             lambda b: (b, 0, 0))]
    operands = [x0]
    for l in range(nlayers):
        in_specs.append(pl.BlockSpec((kt, s_dim * cins[l], s_dim * couts[l]),
                                     lambda b: (0, 0, 0)))
        in_specs.append(pl.BlockSpec((1, s_dim * couts[l]), lambda b: (0, 0)))
        operands += [conv_w_packed[l], conv_b_packed[l]]
    in_specs.append(pl.BlockSpec((s_dim * c_last, n_pad), lambda b: (0, 0)))
    in_specs.append(pl.BlockSpec((1, n_pad), lambda b: (0, 0)))
    operands += [wfc, bfc]

    out_shapes = [jax.ShapeDtypeStruct((B, t_dim, n_pad), jnp.float32),
                  jax.ShapeDtypeStruct((B, t_dim, n_pad), jnp.float32)]
    out_specs = [pl.BlockSpec((1, t_dim, n_pad), lambda b: (b, 0, 0)),
                 pl.BlockSpec((1, t_dim, n_pad), lambda b: (b, 0, 0))]
    if need_activations:
        for l in range(nlayers):
            out_shapes.append(jax.ShapeDtypeStruct(
                (B, t_dim, s_dim * couts[l]), jnp.float32))
            out_specs.append(pl.BlockSpec((1, t_dim, s_dim * couts[l]),
                                          lambda b: (b, 0, 0)))

    # Inter-layer activations (with time halo) live only in VMEM scratch.
    scratch_shapes = [
        pltpu.VMEM((t_dim + 2 * pt, s_dim * couts[l]), jnp.float32)
        for l in range(nlayers - 1)]

    outs = pl.pallas_call(
        kernel,
        out_shape=tuple(out_shapes),
        grid_spec=pltpu.PrefetchScalarGridSpec(
            num_scalar_prefetch=0,
            grid=(B,),
            in_specs=in_specs,
            out_specs=tuple(out_specs),
            scratch_shapes=scratch_shapes),
        compiler_params=pltpu.CompilerParams(
            dimension_semantics=("parallel",)),
    )(*operands)

    score = outs[0][:, :, :nclasses]
    probs = outs[1][:, :, :nclasses]
    net = {}
    if need_activations:
        for l in range(nlayers):
            act = outs[2 + l].reshape(B, t_dim, s_dim, couts[l])
            net[f'spatiotemporal{l}'] = jnp.transpose(act, (0, 3, 2, 1))
    net['score'] = score
    return score, probs, net


# --------------------------------------------------------------------------
# Pure-JAX reference (mirrors the PyTorch forward) for validation.
# --------------------------------------------------------------------------
def reference_forward(x_nchw, conv_weights, conv_biases, fc_weight, fc_bias,
                      *, s_kernelsize, t_kernelsize):
    ks, kt = s_kernelsize, t_kernelsize
    ps, pt = (ks - 1) // 2, (kt - 1) // 2
    y = x_nchw.astype(jnp.float32)
    acts = []
    for w, b in zip(conv_weights, conv_biases):
        y = jax.lax.conv_general_dilated(
            y, w.astype(jnp.float32), window_strides=(1, 1),
            padding=[(ps, ps), (pt, pt)],
            dimension_numbers=('NCHW', 'OIHW', 'NCHW'))
        y = jnp.maximum(y + b.astype(jnp.float32)[None, :, None, None], 0.0)
        acts.append(y)
    B, C, S, T = y.shape
    feat = jnp.transpose(y, (0, 3, 1, 2)).reshape(B, T, C * S)
    score = feat @ fc_weight.astype(jnp.float32).T + fc_bias.astype(jnp.float32)
    probs = jax.nn.softmax(score, axis=-1)
    return score, probs, acts


if __name__ == "__main__":
    # Config consistent with the torch module: arch_type='spatiotemporal',
    # nlayers=2, n_skernels=[8, 8], s_kernelsize=t_kernelsize=3, stride 1,
    # padding=(ks-1)//2, task='letter_reconstruction',
    # input_shape=[2, 16, 32], outtime=32, nclasses=20.
    B, C_IN, S, T = 2, 2, 16, 32
    NLAYERS, N_KERNELS = 2, (8, 8)
    KS = KT = 3
    NCLASSES = 20

    key = jax.random.PRNGKey(0)
    keys = jax.random.split(key, 2 * NLAYERS + 3)

    x = jax.random.normal(keys[0], (B, C_IN, S, T), jnp.float32)

    conv_ws, conv_bs = [], []
    cin = C_IN
    for li in range(NLAYERS):
        cout = N_KERNELS[li]
        fan_in = cin * KS * KT
        conv_ws.append(jax.random.normal(keys[1 + 2 * li], (cout, cin, KS, KT),
                                         jnp.float32) / jnp.sqrt(float(fan_in)))
        conv_bs.append(0.1 * jax.random.normal(keys[2 + 2 * li], (cout,),
                                               jnp.float32))
        cin = cout

    feat = N_KERNELS[-1] * S
    fc_w = jax.random.normal(keys[-2], (NCLASSES, feat),
                             jnp.float32) / jnp.sqrt(float(feat))
    fc_b = 0.1 * jax.random.normal(keys[-1], (NCLASSES,), jnp.float32)

    score_ref, probs_ref, acts_ref = reference_forward(
        x, conv_ws, conv_bs, fc_w, fc_b, s_kernelsize=KS, t_kernelsize=KT)

    # Fused Pallas forward (bf16 MXU operands, f32 accumulate + epilogues),
    # with activations materialized to validate them too.
    fwd = jax.jit(functools.partial(
        spatiotemporal_causal_forward,
        s_kernelsize=KS, t_kernelsize=KT, nclasses=NCLASSES,
        need_activations=True))
    score, probs, net = fwd(x, conv_ws, conv_bs, fc_w, fc_b)
    jax.block_until_ready((score, probs))

    assert score.shape == (B, T, NCLASSES) and probs.shape == (B, T, NCLASSES)
    # bf16 matmul operands -> moderate tolerances (f32 accumulation keeps the
    # drift well below these bounds; layout bugs would be O(1) off).
    assert jnp.allclose(score, score_ref, atol=6e-2, rtol=6e-2), \
        float(jnp.max(jnp.abs(score - score_ref)))
    assert jnp.allclose(probs, probs_ref, atol=2e-2, rtol=2e-2), \
        float(jnp.max(jnp.abs(probs - probs_ref)))
    assert jnp.allclose(jnp.sum(probs, axis=-1), 1.0, atol=1e-3)
    for li in range(NLAYERS):
        assert jnp.allclose(net[f'spatiotemporal{li}'], acts_ref[li],
                            atol=6e-2, rtol=6e-2), li

    # Default (lean) path: intermediate activations stay in VMEM only.
    fwd_lean = jax.jit(functools.partial(
        spatiotemporal_causal_forward,
        s_kernelsize=KS, t_kernelsize=KT, nclasses=NCLASSES))
    score2, probs2, net2 = fwd_lean(x, conv_ws, conv_bs, fc_w, fc_b)
    jax.block_until_ready((score2, probs2))
    assert jnp.allclose(score2, score, atol=1e-5, rtol=1e-5)
    assert set(net2.keys()) == {'score'}

    print("KERNEL_OK")
</pallas_src>

<mosaic_0001>
module attributes {stable_mosaic.version = 11 : i64} {
  func.func @_fused_kernel(%arg0: i32, %arg1: memref<1x34x32xf32, #tpu.memory_space<vmem>>, %arg2: memref<3x32x128xbf16, #tpu.memory_space<vmem>>, %arg3: memref<1x128xf32, #tpu.memory_space<vmem>>, %arg4: memref<3x128x128xbf16, #tpu.memory_space<vmem>>, %arg5: memref<1x128xf32, #tpu.memory_space<vmem>>, %arg6: memref<128x128xbf16, #tpu.memory_space<vmem>>, %arg7: memref<1x128xf32, #tpu.memory_space<vmem>>, %arg8: memref<1x32x128xf32, #tpu.memory_space<vmem>>, %arg9: memref<1x32x128xf32, #tpu.memory_space<vmem>>, %arg10: memref<1x32x128xf32, #tpu.memory_space<vmem>>, %arg11: memref<1x32x128xf32, #tpu.memory_space<vmem>>, %arg12: memref<34x128xf32, #tpu.memory_space<vmem>>) attributes {dimension_semantics = [#tpu.dimension_semantics<parallel>], iteration_bounds = array<i64: 2>, scalar_prefetch = 0 : i64, scratch_operands = 1 : i64, tpu.core_type = #tpu.core_type<tc>, window_params = [{transform_indices = @transform_0, window_bounds = array<i64: 1, 34, 32>}, {pipeline_mode = #tpu.pipeline_mode<synchronous>, transform_indices = @transform_1, window_bounds = array<i64: 3, 32, 128>}, {pipeline_mode = #tpu.pipeline_mode<synchronous>, transform_indices = @transform_2, window_bounds = array<i64: 1, 128>}, {pipeline_mode = #tpu.pipeline_mode<synchronous>, transform_indices = @transform_3, window_bounds = array<i64: 3, 128, 128>}, {pipeline_mode = #tpu.pipeline_mode<synchronous>, transform_indices = @transform_4, window_bounds = array<i64: 1, 128>}, {pipeline_mode = #tpu.pipeline_mode<synchronous>, transform_indices = @transform_5, window_bounds = array<i64: 128, 128>}, {pipeline_mode = #tpu.pipeline_mode<synchronous>, transform_indices = @transform_6, window_bounds = array<i64: 1, 128>}, {transform_indices = @transform_7, window_bounds = array<i64: 1, 32, 128>}, {transform_indices = @transform_8, window_bounds = array<i64: 1, 32, 128>}, {transform_indices = @transform_9, window_bounds = array<i64: 1, 32, 128>}, {transform_indices = @transform_10, window_bounds = array<i64: 1, 32, 128>}]} {
    %cst = arith.constant 0.000000e+00 : f32
    %0 = vector.broadcast %cst : f32 to vector<32x128xf32>
    %c0 = arith.constant 0 : index
    %c0_0 = arith.constant 0 : index
    %c0_1 = arith.constant 0 : index
    %1 = vector.load %arg1[%c0, %c0_0, %c0_1] : memref<1x34x32xf32, #tpu.memory_space<vmem>>, vector<1x32x32xf32>
    %2 = vector.shape_cast %1 : vector<1x32x32xf32> to vector<32x32xf32>
    %3 = arith.truncf %2 : vector<32x32xf32> to vector<32x32xbf16>
    %c0_2 = arith.constant 0 : index
    %c0_3 = arith.constant 0 : index
    %c0_4 = arith.constant 0 : index
    %4 = vector.load %arg2[%c0_2, %c0_3, %c0_4] : memref<3x32x128xbf16, #tpu.memory_space<vmem>>, vector<1x32x128xbf16>
    %5 = vector.shape_cast %4 : vector<1x32x128xbf16> to vector<32x128xbf16>
    %cst_5 = arith.constant dense<0.000000e+00> : vector<32x128xf32>
    %6 = tpu.matmul %3, %5, %cst_5 {dimension_numbers = #tpu.dot_dimension_numbers<[1], [0], [0], [1], [0, 0, 1, 1], [], []>} : vector<32x32xbf16>, vector<32x128xbf16>, vector<32x128xf32> -> vector<32x128xf32>
    %7 = arith.addf %0, %6 : vector<32x128xf32>
    %c0_6 = arith.constant 0 : index
    %c1 = arith.constant 1 : index
    %c0_7 = arith.constant 0 : index
    %8 = vector.load %arg1[%c0_6, %c1, %c0_7] : memref<1x34x32xf32, #tpu.memory_space<vmem>>, vector<1x32x32xf32>
    %9 = vector.shape_cast %8 : vector<1x32x32xf32> to vector<32x32xf32>
    %10 = arith.truncf %9 : vector<32x32xf32> to vector<32x32xbf16>
    %c1_8 = arith.constant 1 : index
    %c0_9 = arith.constant 0 : index
    %c0_10 = arith.constant 0 : index
    %11 = vector.load %arg2[%c1_8, %c0_9, %c0_10] : memref<3x32x128xbf16, #tpu.memory_space<vmem>>, vector<1x32x128xbf16>
    %12 = vector.shape_cast %11 : vector<1x32x128xbf16> to vector<32x128xbf16>
    %cst_11 = arith.constant dense<0.000000e+00> : vector<32x128xf32>
    %13 = tpu.matmul %10, %12, %cst_11 {dimension_numbers = #tpu.dot_dimension_numbers<[1], [0], [0], [1], [0, 0, 1, 1], [], []>} : vector<32x32xbf16>, vector<32x128xbf16>, vector<32x128xf32> -> vector<32x128xf32>
    %14 = arith.addf %7, %13 : vector<32x128xf32>
    %c0_12 = arith.constant 0 : index
    %c2 = arith.constant 2 : index
    %c0_13 = arith.constant 0 : index
    %15 = vector.load %arg1[%c0_12, %c2, %c0_13] : memref<1x34x32xf32, #tpu.memory_space<vmem>>, vector<1x32x32xf32>
    %16 = vector.shape_cast %15 : vector<1x32x32xf32> to vector<32x32xf32>
    %17 = arith.truncf %16 : vector<32x32xf32> to vector<32x32xbf16>
    %c2_14 = arith.constant 2 : index
    %c0_15 = arith.constant 0 : index
    %c0_16 = arith.constant 0 : index
    %18 = vector.load %arg2[%c2_14, %c0_15, %c0_16] : memref<3x32x128xbf16, #tpu.memory_space<vmem>>, vector<1x32x128xbf16>
    %19 = vector.shape_cast %18 : vector<1x32x128xbf16> to vector<32x128xbf16>
    %cst_17 = arith.constant dense<0.000000e+00> : vector<32x128xf32>
    %20 = tpu.matmul %17, %19, %cst_17 {dimension_numbers = #tpu.dot_dimension_numbers<[1], [0], [0], [1], [0, 0, 1, 1], [], []>} : vector<32x32xbf16>, vector<32x128xbf16>, vector<32x128xf32> -> vector<32x128xf32>
    %21 = arith.addf %14, %20 : vector<32x128xf32>
    %c0_18 = arith.constant 0 : index
    %c0_19 = arith.constant 0 : index
    %22 = vector.load %arg3[%c0_18, %c0_19] : memref<1x128xf32, #tpu.memory_space<vmem>>, vector<1x128xf32>
    %23 = vector.broadcast %22 : vector<1x128xf32> to vector<32x128xf32>
    %24 = arith.addf %21, %23 : vector<32x128xf32>
    %cst_20 = arith.constant 0.000000e+00 : f32
    %25 = vector.broadcast %cst_20 : f32 to vector<32x128xf32>
    %26 = arith.maximumf %24, %25 : vector<32x128xf32>
    %c0_21 = arith.constant 0 : index
    %c0_22 = arith.constant 0 : index
    %c0_23 = arith.constant 0 : index
    %27 = vector.load %arg10[%c0_21, %c0_22, %c0_23] : memref<1x32x128xf32, #tpu.memory_space<vmem>>, vector<1x32x128xf32>
    %28 = vector.shape_cast %27 : vector<1x32x128xf32> to vector<32x128xf32>
    %29 = vector.shape_cast %26 : vector<32x128xf32> to vector<1x32x128xf32>
    tpu.vector_store %arg10[%c0_21, %c0_22, %c0_23], %29 {strides = array<i32>} : memref<1x32x128xf32, #tpu.memory_space<vmem>>, vector<1x32x128xf32>,
    %c1_24 = arith.constant 1 : index
    %c0_25 = arith.constant 0 : index
    %30 = vector.load %arg12[%c1_24, %c0_25] : memref<34x128xf32, #tpu.memory_space<vmem>>, vector<32x128xf32>
    tpu.vector_store %arg12[%c1_24, %c0_25], %26 {strides = array<i32>} : memref<34x128xf32, #tpu.memory_space<vmem>>, vector<32x128xf32>,
    %cst_26 = arith.constant 0.000000e+00 : f32
    %31 = vector.broadcast %cst_26 : f32 to vector<1x128xf32>
    %c0_27 = arith.constant 0 : index
    %c0_28 = arith.constant 0 : index
    %32 = vector.load %arg12[%c0_27, %c0_28] : memref<34x128xf32, #tpu.memory_space<vmem>>, vector<1x128xf32>
    tpu.vector_store %arg12[%c0_27, %c0_28], %31 {strides = array<i32>} : memref<34x128xf32, #tpu.memory_space<vmem>>, vector<1x128xf32>,
    %c33 = arith.constant 33 : index
    %c0_29 = arith.constant 0 : index
    %33 = vector.load %arg12[%c33, %c0_29] : memref<34x128xf32, #tpu.memory_space<vmem>>, vector<1x128xf32>
    tpu.vector_store %arg12[%c33, %c0_29], %31 {strides = array<i32>} : memref<34x128xf32, #tpu.memory_space<vmem>>, vector<1x128xf32>,
    %cst_30 = arith.constant 0.000000e+00 : f32
    %34 = vector.broadcast %cst_30 : f32 to vector<32x128xf32>
    %c0_31 = arith.constant 0 : index
    %c0_32 = arith.constant 0 : index
    %35 = vector.load %arg12[%c0_31, %c0_32] : memref<34x128xf32, #tpu.memory_space<vmem>>, vector<32x128xf32>
    %36 = arith.truncf %35 : vector<32x128xf32> to vector<32x128xbf16>
    %c0_33 = arith.constant 0 : index
    %c0_34 = arith.constant 0 : index
    %c0_35 = arith.constant 0 : index
    %37 = vector.load %arg4[%c0_33, %c0_34, %c0_35] : memref<3x128x128xbf16, #tpu.memory_space<vmem>>, vector<1x128x128xbf16>
    %38 = vector.shape_cast %37 : vector<1x128x128xbf16> to vector<128x128xbf16>
    %cst_36 = arith.constant dense<0.000000e+00> : vector<32x128xf32>
    %39 = tpu.matmul %36, %38, %cst_36 {dimension_numbers = #tpu.dot_dimension_numbers<[1], [0], [0], [1], [0, 0, 1, 1], [], []>} : vector<32x128xbf16>, vector<128x128xbf16>, vector<32x128xf32> -> vector<32x128xf32>
    %40 = arith.addf %34, %39 : vector<32x128xf32>
    %c1_37 = arith.constant 1 : index
    %c0_38 = arith.constant 0 : index
    %41 = vector.load %arg12[%c1_37, %c0_38] : memref<34x128xf32, #tpu.memory_space<vmem>>, vector<32x128xf32>
    %42 = arith.truncf %41 : vector<32x128xf32> to vector<32x128xbf16>
    %c1_39 = arith.constant 1 : index
    %c0_40 = arith.constant 0 : index
    %c0_41 = arith.constant 0 : index
    %43 = vector.load %arg4[%c1_39, %c0_40, %c0_41] : memref<3x128x128xbf16, #tpu.memory_space<vmem>>, vector<1x128x128xbf16>
    %44 = vector.shape_cast %43 : vector<1x128x128xbf16> to vector<128x128xbf16>
    %cst_42 = arith.constant dense<0.000000e+00> : vector<32x128xf32>
    %45 = tpu.matmul %42, %44, %cst_42 {dimension_numbers = #tpu.dot_dimension_numbers<[1], [0], [0], [1], [0, 0, 1, 1], [], []>} : vector<32x128xbf16>, vector<128x128xbf16>, vector<32x128xf32> -> vector<32x128xf32>
    %46 = arith.addf %40, %45 : vector<32x128xf32>
    %c2_43 = arith.constant 2 : index
    %c0_44 = arith.constant 0 : index
    %47 = vector.load %arg12[%c2_43, %c0_44] : memref<34x128xf32, #tpu.memory_space<vmem>>, vector<32x128xf32>
    %48 = arith.truncf %47 : vector<32x128xf32> to vector<32x128xbf16>
    %c2_45 = arith.constant 2 : index
    %c0_46 = arith.constant 0 : index
    %c0_47 = arith.constant 0 : index
    %49 = vector.load %arg4[%c2_45, %c0_46, %c0_47] : memref<3x128x128xbf16, #tpu.memory_space<vmem>>, vector<1x128x128xbf16>
    %50 = vector.shape_cast %49 : vector<1x128x128xbf16> to vector<128x128xbf16>
    %cst_48 = arith.constant dense<0.000000e+00> : vector<32x128xf32>
    %51 = tpu.matmul %48, %50, %cst_48 {dimension_numbers = #tpu.dot_dimension_numbers<[1], [0], [0], [1], [0, 0, 1, 1], [], []>} : vector<32x128xbf16>, vector<128x128xbf16>, vector<32x128xf32> -> vector<32x128xf32>
    %52 = arith.addf %46, %51 : vector<32x128xf32>
    %c0_49 = arith.constant 0 : index
    %c0_50 = arith.constant 0 : index
    %53 = vector.load %arg5[%c0_49, %c0_50] : memref<1x128xf32, #tpu.memory_space<vmem>>, vector<1x128xf32>
    %54 = vector.broadcast %53 : vector<1x128xf32> to vector<32x128xf32>
    %55 = arith.addf %52, %54 : vector<32x128xf32>
    %cst_51 = arith.constant 0.000000e+00 : f32
    %56 = vector.broadcast %cst_51 : f32 to vector<32x128xf32>
    %57 = arith.maximumf %55, %56 : vector<32x128xf32>
    %c0_52 = arith.constant 0 : index
    %c0_53 = arith.constant 0 : index
    %c0_54 = arith.constant 0 : index
    %58 = vector.load %arg11[%c0_52, %c0_53, %c0_54] : memref<1x32x128xf32, #tpu.memory_space<vmem>>, vector<1x32x128xf32>
    %59 = vector.shape_cast %58 : vector<1x32x128xf32> to vector<32x128xf32>
    %60 = vector.shape_cast %57 : vector<32x128xf32> to vector<1x32x128xf32>
    tpu.vector_store %arg11[%c0_52, %c0_53, %c0_54], %60 {strides = array<i32>} : memref<1x32x128xf32, #tpu.memory_space<vmem>>, vector<1x32x128xf32>,
    %61 = arith.truncf %57 : vector<32x128xf32> to vector<32x128xbf16>
    %c0_55 = arith.constant 0 : index
    %c0_56 = arith.constant 0 : index
    %62 = vector.load %arg6[%c0_55, %c0_56] : memref<128x128xbf16, #tpu.memory_space<vmem>>, vector<128x128xbf16>
    %cst_57 = arith.constant dense<0.000000e+00> : vector<32x128xf32>
    %63 = tpu.matmul %61, %62, %cst_57 {dimension_numbers = #tpu.dot_dimension_numbers<[1], [0], [0], [1], [0, 0, 1, 1], [], []>} : vector<32x128xbf16>, vector<128x128xbf16>, vector<32x128xf32> -> vector<32x128xf32>
    %c0_58 = arith.constant 0 : index
    %c0_59 = arith.constant 0 : index
    %64 = vector.load %arg7[%c0_58, %c0_59] : memref<1x128xf32, #tpu.memory_space<vmem>>, vector<1x128xf32>
    %65 = vector.broadcast %64 : vector<1x128xf32> to vector<32x128xf32>
    %66 = arith.addf %63, %65 : vector<32x128xf32>
    %c0_60 = arith.constant 0 : index
    %c0_61 = arith.constant 0 : index
    %c0_62 = arith.constant 0 : index
    %67 = vector.load %arg8[%c0_60, %c0_61, %c0_62] : memref<1x32x128xf32, #tpu.memory_space<vmem>>, vector<1x32x128xf32>
    %68 = vector.shape_cast %67 : vector<1x32x128xf32> to vector<32x128xf32>
    %69 = vector.shape_cast %66 : vector<32x128xf32> to vector<1x32x128xf32>
    tpu.vector_store %arg8[%c0_60, %c0_61, %c0_62], %69 {strides = array<i32>} : memref<1x32x128xf32, #tpu.memory_space<vmem>>, vector<1x32x128xf32>,
    %70 = tpu.iota {dimensions = array<i32: 1>} : vector<32x128xi32>
    %c20_i32 = arith.constant 20 : i32
    %71 = vector.broadcast %c20_i32 : i32 to vector<32x128xi32>
    %72 = arith.cmpi slt, %70, %71 : vector<32x128xi32>
    %cst_63 = arith.constant -1.000000e+30 : f32
    %73 = vector.broadcast %cst_63 : f32 to vector<32x128xf32>
    %74 = arith.select %72, %66, %73 : vector<32x128xi1>, vector<32x128xf32>
    %cst_64 = arith.constant dense<0xFF800000> : vector<32xf32>
    %75 = vector.multi_reduction <maximumf>, %74, %cst_64 [1] : vector<32x128xf32> to vector<32xf32>
    %76 = vector.shape_cast %75 : vector<32xf32> to vector<32x1xf32>
    %77 = vector.broadcast %76 : vector<32x1xf32> to vector<32x128xf32>
    %78 = arith.subf %74, %77 : vector<32x128xf32>
    %79 = math.exp %78 : vector<32x128xf32>
    %cst_65 = arith.constant dense<0.000000e+00> : vector<32xf32>
    %80 = vector.multi_reduction <add>, %79, %cst_65 [1] : vector<32x128xf32> to vector<32xf32>
    %81 = vector.shape_cast %80 : vector<32xf32> to vector<32x1xf32>
    %82 = vector.broadcast %81 : vector<32x1xf32> to vector<32x128xf32>
    %83 = arith.divf %79, %82 : vector<32x128xf32>
    %c0_66 = arith.constant 0 : index
    %c0_67 = arith.constant 0 : index
    %c0_68 = arith.constant 0 : index
    %84 = vector.load %arg9[%c0_66, %c0_67, %c0_68] : memref<1x32x128xf32, #tpu.memory_space<vmem>>, vector<1x32x128xf32>
    %85 = vector.shape_cast %84 : vector<1x32x128xf32> to vector<32x128xf32>
    %86 = vector.shape_cast %83 : vector<32x128xf32> to vector<1x32x128xf32>
    tpu.vector_store %arg9[%c0_66, %c0_67, %c0_68], %86 {strides = array<i32>} : memref<1x32x128xf32, #tpu.memory_space<vmem>>, vector<1x32x128xf32>,
    return
  }
  func.func @transform_0(%arg0: i32) -> (i32, i32, i32) {
    %c0_i32 = arith.constant 0 : i32
    %c0_i32_0 = arith.constant 0 : i32
    %c0_i32_1 = arith.constant 0 : i32
    return %arg0, %c0_i32, %c0_i32_0 : i32, i32, i32
  }
  func.func @transform_1(%arg0: i32) -> (i32, i32, i32) {
    %c0_i32 = arith.constant 0 : i32
    %c0_i32_0 = arith.constant 0 : i32
    %c0_i32_1 = arith.constant 0 : i32
    %c0_i32_2 = arith.constant 0 : i32
    return %c0_i32, %c0_i32_0, %c0_i32_1 : i32, i32, i32
  }
  func.func @transform_2(%arg0: i32) -> (i32, i32) {
    %c0_i32 = arith.constant 0 : i32
    %c0_i32_0 = arith.constant 0 : i32
    %c0_i32_1 = arith.constant 0 : i32
    return %c0_i32, %c0_i32_0 : i32, i32
  }
  func.func @transform_3(%arg0: i32) -> (i32, i32, i32) {
    %c0_i32 = arith.constant 0 : i32
    %c0_i32_0 = arith.constant 0 : i32
    %c0_i32_1 = arith.constant 0 : i32
    %c0_i32_2 = arith.constant 0 : i32
    return %c0_i32, %c0_i32_0, %c0_i32_1 : i32, i32, i32
  }
  func.func @transform_4(%arg0: i32) -> (i32, i32) {
    %c0_i32 = arith.constant 0 : i32
    %c0_i32_0 = arith.constant 0 : i32
    %c0_i32_1 = arith.constant 0 : i32
    return %c0_i32, %c0_i32_0 : i32, i32
  }
  func.func @transform_5(%arg0: i32) -> (i32, i32) {
    %c0_i32 = arith.constant 0 : i32
    %c0_i32_0 = arith.constant 0 : i32
    %c0_i32_1 = arith.constant 0 : i32
    return %c0_i32, %c0_i32_0 : i32, i32
  }
  func.func @transform_6(%arg0: i32) -> (i32, i32) {
    %c0_i32 = arith.constant 0 : i32
    %c0_i32_0 = arith.constant 0 : i32
    %c0_i32_1 = arith.constant 0 : i32
    return %c0_i32, %c0_i32_0 : i32, i32
  }
  func.func @transform_7(%arg0: i32) -> (i32, i32, i32) {
    %c0_i32 = arith.constant 0 : i32
    %c0_i32_0 = arith.constant 0 : i32
    %c0_i32_1 = arith.constant 0 : i32
    return %arg0, %c0_i32, %c0_i32_0 : i32, i32, i32
  }
  func.func @transform_8(%arg0: i32) -> (i32, i32, i32) {
    %c0_i32 = arith.constant 0 : i32
    %c0_i32_0 = arith.constant 0 : i32
    %c0_i32_1 = arith.constant 0 : i32
    return %arg0, %c0_i32, %c0_i32_0 : i32, i32, i32
  }
  func.func @transform_9(%arg0: i32) -> (i32, i32, i32) {
    %c0_i32 = arith.constant 0 : i32
    %c0_i32_0 = arith.constant 0 : i32
    %c0_i32_1 = arith.constant 0 : i32
    return %arg0, %c0_i32, %c0_i32_0 : i32, i32, i32
  }
  func.func @transform_10(%arg0: i32) -> (i32, i32, i32) {
    %c0_i32 = arith.constant 0 : i32
    %c0_i32_0 = arith.constant 0 : i32
    %c0_i32_1 = arith.constant 0 : i32
    return %arg0, %c0_i32, %c0_i32_0 : i32, i32, i32
  }
}

</mosaic_0001>

<llo_original>
// kernel: tile.13
$region0: #{tile.13}
  #allocation0 [shape = 's32[1]{0}', space=sflag, size = 0x4, scoped, tag = 'scoped memory for tile.13']
  %s0 = inlined_call_operand.vmem [shape: f32[8], index: 0, kind: input, shape index: {}]
  %s1 = inlined_call_operand.vmem [shape: f32[16,8], index: 1, kind: output, shape index: {}]
  // Predicated region
  $region2: #{tile.13} parent=0 // pred_check
    _
  $region3: #{tile.13} parent=0 // pred_check_branch
    %3 = sbr.rel (0) target = $region5
  $region4: #{tile.13} parent=0 // pred_region
    _
  $region5: #{tile.13} parent=0 // pred_fallthru
    _
  %v4 = vld [vmem:[%s0] ss:$0 sm:$0xff]
  %5 = vst [vmem:[%s1] sm:$0xff] %v4
  %s6 = scalar_lea.vmem %s1, 8
  %7 = vst [vmem:[%s6] sm:$0xff] %v4

// kernel: tile.14
$region0: #{tile.14}
  %s0 = inlined_call_operand.vmem [shape: f32[16,8], index: 0, kind: input, shape index: {}]
  %s1 = inlined_call_operand.vmem [shape: f32[1,128], index: 1, kind: output, shape index: {}]
  $region1: #{tile.14} parent=0
    #allocation0 [shape = 'u8[4096]{0}', space=vmem, size = 0x1000, scoped, tag = 'scoped mem for output reshape']
    %v2 = vld [vmem:[%s0] sm:$0x1]
    %vm3 = vcmask 64512
    %4 = vst.msk [vmem:[#allocation0] sm:$0x1] %vm3, %v2
    %s5 = scalar_lea.vmem %s0, 15
    %v6 = vld [vmem:[%s5] sm:$0x1]
    %7 = vrot.lane.b32.xlu0 %v6, 120
    %v8 = vpop.permute.xlu0 %7
    %vm9 = vcmask 1048512
    %10 = vst.msk [vmem:[#allocation0] sm:$0x1] %vm9, %v8
    %s11 = scalar_lea.vmem %s0, 14
    %v12 = vld [vmem:[%s11] sm:$0x1]
    %13 = vrot.lane.b32.xlu0 %v12, 112
    %v14 = vpop.permute.xlu0 %13
    %vm15 = vcmask 982912
    %16 = vst.msk [vmem:[#allocation0] sm:$0x1] %vm15, %v14
    %s17 = scalar_lea.vmem %s0, 13
    %v18 = vld [vmem:[%s17] sm:$0x1]
    %19 = vrot.lane.b32.xlu0 %v18, 104
    %v20 = vpop.permute.xlu0 %19
    %vm21 = vcmask 917312
    %22 = vst.msk [vmem:[#allocation0] sm:$0x1] %vm21, %v20
    %s23 = scalar_lea.vmem %s0, 12
    %v24 = vld [vmem:[%s23] sm:$0x1]
    %25 = vrot.lane.b32.xlu0 %v24, 96
    %v26 = vpop.permute.xlu0 %25
    %vm27 = vcmask 851712
    %28 = vst.msk [vmem:[#allocation0] sm:$0x1] %vm27, %v26
    %s29 = scalar_lea.vmem %s0, 11
    %v30 = vld [vmem:[%s29] sm:$0x1]
    %31 = vrot.lane.b32.xlu0 %v30, 88
    %v32 = vpop.permute.xlu0 %31
    %vm33 = vcmask 786112
    %34 = vst.msk [vmem:[#allocation0] sm:$0x1] %vm33, %v32
    %s35 = scalar_lea.vmem %s0, 10
    %v36 = vld [vmem:[%s35] sm:$0x1]
    %37 = vrot.lane.b32.xlu0 %v36, 80
    %v38 = vpop.permute.xlu0 %37
    %vm39 = vcmask 720512
    %40 = vst.msk [vmem:[#allocation0] sm:$0x1] %vm39, %v38
    %s41 = scalar_lea.vmem %s0, 9
    %v42 = vld [vmem:[%s41] sm:$0x1]
    %43 = vrot.lane.b32.xlu0 %v42, 72
    %v44 = vpop.permute.xlu0 %43
    %vm45 = vcmask 654912
    %46 = vst.msk [vmem:[#allocation0] sm:$0x1] %vm45, %v44
    %s47 = scalar_lea.vmem %s0, 8
    %v48 = vld [vmem:[%s47] sm:$0x1]
    %49 = vrot.lane.b32.xlu0 %v48, 64
    %v50 = vpop.permute.xlu0 %49
    %vm51 = vcmask 589312
    %52 = vst.msk [vmem:[#allocation0] sm:$0x1] %vm51, %v50
    %s53 = scalar_lea.vmem %s0, 7
    %v54 = vld [vmem:[%s53] sm:$0x1]
    %55 = vrot.lane.b32.xlu0 %v54, 56
    %v56 = vpop.permute.xlu0 %55
    %vm57 = vcmask 523712
    %58 = vst.msk [vmem:[#allocation0] sm:$0x1] %vm57, %v56
    %s59 = scalar_lea.vmem %s0, 6
    %v60 = vld [vmem:[%s59] sm:$0x1]
    %61 = vrot.lane.b32.xlu0 %v60, 48
    %v62 = vpop.permute.xlu0 %61
    %vm63 = vcmask 458112
    %64 = vst.msk [vmem:[#allocation0] sm:$0x1] %vm63, %v62
    %s65 = scalar_lea.vmem %s0, 5
    %v66 = vld [vmem:[%s65] sm:$0x1]
    %67 = vrot.lane.b32.xlu0 %v66, 40
    %v68 = vpop.permute.xlu0 %67
    %vm69 = vcmask 392512
    %70 = vst.msk [vmem:[#allocation0] sm:$0x1] %vm69, %v68
    %s71 = scalar_lea.vmem %s0, 4
    %v72 = vld [vmem:[%s71] sm:$0x1]
    %73 = vrot.lane.b32.xlu0 %v72, 32
    %v74 = vpop.permute.xlu0 %73
    %vm75 = vcmask 326912
    %76 = vst.msk [vmem:[#allocation0] sm:$0x1] %vm75, %v74
    %s77 = scalar_lea.vmem %s0, 3
    %v78 = vld [vmem:[%s77] sm:$0x1]
    %79 = vrot.lane.b32.xlu0 %v78, 24
    %v80 = vpop.permute.xlu0 %79
    %vm81 = vcmask 261312
    %82 = vst.msk [vmem:[#allocation0] sm:$0x1] %vm81, %v80
    %s83 = scalar_lea.vmem %s0, 2
    %v84 = vld [vmem:[%s83] sm:$0x1]
    %85 = vrot.lane.b32.xlu0 %v84, 16
    %v86 = vpop.permute.xlu0 %85
    %vm87 = vcmask 195712
    %88 = vst.msk [vmem:[#allocation0] sm:$0x1] %vm87, %v86
    %s89 = scalar_lea.vmem %s0, 1
    %v90 = vld [vmem:[%s89] sm:$0x1]
    %91 = vrot.lane.b32.xlu0 %v90, 8
    %v92 = vpop.permute.xlu0 %91
    %vm93 = vcmask 130112
    %94 = vst.msk [vmem:[#allocation0] sm:$0x1] %vm93, %v92
    %s96 = sshll.u32 1, 1
    %s97 = ssub.s32 %s96, 1
    %v99 = vld [vmem:[#allocation0] sm:%s97]
    %s100 = sshll.u32 1, 1
    %s101 = ssub.s32 %s100, 1
    %102 = vst [vmem:[%s1] sm:%s101] %v99

// kernel: spatiotemporal_causal_forward.1
$region0: #{spatiotemporal_causal_forward.1}
  #allocation0 [shape = 'u32[]', space=smem, size = 0x4, offset = 0x4, fixed_abs, tag = 'smem constant byte address 0x4 - core index']
  #allocation1 [shape = 'u32[144,128]{1,0:T(1,128)}', space=vmem, size = 0x12000, scoped, tag = 'internal scratch']
  #allocation2 [shape = 'f32[34,128]{1,0:T(8,128)}', space=vmem, size = 0x5000, scoped, tag = 'scratch operand']
  %s0 = inlined_call_operand.vmem [shape: f32[2,34,32], index: 0, kind: input, shape index: {}]
  %s1 = inlined_call_operand.vmem [shape: bf16[3,32,128], index: 1, kind: input, shape index: {}]
  %s2 = inlined_call_operand.vmem [shape: f32[1,128], index: 2, kind: input, shape index: {}]
  %s3 = inlined_call_operand.vmem [shape: bf16[3,128,128], index: 3, kind: input, shape index: {}]
  %s4 = inlined_call_operand.vmem [shape: f32[1,128], index: 4, kind: input, shape index: {}]
  %s5 = inlined_call_operand.vmem [shape: bf16[128,128], index: 5, kind: input, shape index: {}]
  %s6 = inlined_call_operand.vmem [shape: f32[1,128], index: 6, kind: input, shape index: {}]
  %s7 = inlined_call_operand.vmem [shape: f32[2,32,128], index: 7, kind: output, shape index: {0}]
  %s8 = inlined_call_operand.vmem [shape: f32[2,32,128], index: 8, kind: output, shape index: {1}]
  %s9 = inlined_call_operand.vmem [shape: f32[2,32,128], index: 9, kind: output, shape index: {2}]
  %s10 = inlined_call_operand.vmem [shape: f32[2,32,128], index: 10, kind: output, shape index: {3}]
  %11 = xla_tuple %s7, %s8, %s9, %s10
  %s12 = sld [smem:[#allocation0]]
  $region85: #{spatiotemporal_causal_forward.1} parent=0
    _
  %s14 = ssub.s32 1, %s12
  %s15 = scalar_select 0, %s14, %s12
  loop: start=0, step=1, limit=4
  $region2: #{spatiotemporal_causal_forward.1} parent=0 // loop_pre_header
    _
  $region3: #{spatiotemporal_causal_forward.1} parent=0 // loop_header
    %s17 = sphi 0, %s21
    %p18 = scmp.ge.s32.totalorder %s17, 4
    %s27 = sphi 0, %s29
    %s30 = sphi 0, %s27
    %s31 = sphi 0, %s30
    %s47 = sphi 0, %s31
    %s51 = sphi 0, %s51
    %s53 = sphi 0, %s51
    %s54 = sphi 0, %s53
    %s68 = sphi 0, %s54
    %s72 = sphi 0, %s72
    %s74 = sphi 0, %s72
    %s75 = sphi 0, %s74
    %s89 = sphi 0, %s75
    %s93 = sphi 0, %s93
    %s95 = sphi 0, %s93
    %s96 = sphi 0, %s95
    %s110 = sphi 0, %s96
    %s114 = sphi 0, %s114
    %s116 = sphi 0, %s114
    %s117 = sphi 0, %s116
    %s131 = sphi 0, %s117
    %s135 = sphi 0, %s135
    %s137 = sphi 0, %s135
    %s138 = sphi 0, %s137
    %s152 = sphi 0, %s138
    %s156 = sphi 0, %s156
    %s158 = sphi 0, %s156
    %s159 = sphi 0, %s158
    %s173 = sphi 0, %s159
    %s179 = sphi 0, %s181
    %s182 = sphi 0, %s179
    %s183 = sphi 0, %s182
    %s199 = sphi 0, %s183
    %s205 = sphi 0, %s207
    %s208 = sphi 0, %s205
    %s209 = sphi 0, %s208
    %s225 = sphi 0, %s209
    %s231 = sphi 0, %s233
    %s234 = sphi 0, %s231
    %s235 = sphi 0, %s234
    %s251 = sphi 0, %s235
    %s257 = sphi 0, %s259
    %s260 = sphi 0, %s257
    %s261 = sphi 0, %s260
    %s277 = sphi 0, %s261
  $region4: #{spatiotemporal_causal_forward.1} parent=0 // loop_header_branch
    %20 = sbr.rel (%p18) target = $region8
  $region5: #{spatiotemporal_causal_forward.1} parent=0 // loop_body
    %s22 = ssub.s32 %s17, 1
    %s23 = ssub.s32 %s17, 2
    %s24 = sadd.s32 %s17, 1
    %s25 = ssub.s32 %s17, %s24
    %p26 = scmp.eq.s32.totalorder %s25, 0
    %s28 = sadd.s32 %s27, 1
    %s29 = scalar_select %p26, %s27, %s28
    %p32 = pneg %p26
    %p33 = scmp.eq.s32.totalorder %s17, 1
    %p34 = por %p32, %p33
    %p35 = scmp.ne.s32.totalorder %s27, %s30
    %p36 = scmp.eq.s32.totalorder %s17, 0
    %p37 = por %p35, %p36
    %p38 = scmp.ne.s32.totalorder %s27, %s30
    %p39 = scmp.eq.s32.totalorder %s22, 1
    %p40 = por %p38, %p39
    %p41 = scmp.ne.s32.totalorder %s30, %s31
    %p42 = scmp.eq.s32.totalorder %s22, 0
    %p43 = por %p41, %p42
    %p44 = scmp.ne.s32.totalorder %s30, %s31
    %p45 = scmp.eq.s32.totalorder %s23, 1
    %p46 = por %p44, %p45
    %p48 = scmp.ne.s32.totalorder %s31, %s47
    %p49 = scmp.eq.s32.totalorder %s23, 0
    %p50 = por %p48, %p49
    %s52 = sadd.s32 %s51, 1
    %p55 = scmp.eq.s32.totalorder %s17, 1
    %p56 = scmp.ne.s32.totalorder %s51, %s53
    %p57 = scmp.eq.s32.totalorder %s17, 0
    %p58 = por %p56, %p57
    %p59 = scmp.ne.s32.totalorder %s51, %s53
    %p60 = scmp.eq.s32.totalorder %s22, 1
    %p61 = por %p59, %p60
    %p62 = scmp.ne.s32.totalorder %s53, %s54
    %p63 = scmp.eq.s32.totalorder %s22, 0
    %p64 = por %p62, %p63
    %p65 = scmp.ne.s32.totalorder %s53, %s54
    %p66 = scmp.eq.s32.totalorder %s23, 1
    %p67 = por %p65, %p66
    %p69 = scmp.ne.s32.totalorder %s54, %s68
    %p70 = scmp.eq.s32.totalorder %s23, 0
    %p71 = por %p69, %p70
    %s73 = sadd.s32 %s72, 1
    %p76 = scmp.eq.s32.totalorder %s17, 1
    %p77 = scmp.ne.s32.totalorder %s72, %s74
    %p78 = scmp.eq.s32.totalorder %s17, 0
    %p79 = por %p77, %p78
    %p80 = scmp.ne.s32.totalorder %s72, %s74
    %p81 = scmp.eq.s32.totalorder %s22, 1
    %p82 = por %p80, %p81
    %p83 = scmp.ne.s32.totalorder %s74, %s75
    %p84 = scmp.eq.s32.totalorder %s22, 0
    %p85 = por %p83, %p84
    %p86 = scmp.ne.s32.totalorder %s74, %s75
    %p87 = scmp.eq.s32.totalorder %s23, 1
    %p88 = por %p86, %p87
    %p90 = scmp.ne.s32.totalorder %s75, %s89
    %p91 = scmp.eq.s32.totalorder %s23, 0
    %p92 = por %p90, %p91
    %s94 = sadd.s32 %s93, 1
    %p97 = scmp.eq.s32.totalorder %s17, 1
    %p98 = scmp.ne.s32.totalorder %s93, %s95
    %p99 = scmp.eq.s32.totalorder %s17, 0
    %p100 = por %p98, %p99
    %p101 = scmp.ne.s32.totalorder %s93, %s95
    %p102 = scmp.eq.s32.totalorder %s22, 1
    %p103 = por %p101, %p102
    %p104 = scmp.ne.s32.totalorder %s95, %s96
    %p105 = scmp.eq.s32.totalorder %s22, 0
    %p106 = por %p104, %p105
    %p107 = scmp.ne.s32.totalorder %s95, %s96
    %p108 = scmp.eq.s32.totalorder %s23, 1
    %p109 = por %p107, %p108
    %p111 = scmp.ne.s32.totalorder %s96, %s110
    %p112 = scmp.eq.s32.totalorder %s23, 0
    %p113 = por %p111, %p112
    %s115 = sadd.s32 %s114, 1
    %p118 = scmp.eq.s32.totalorder %s17, 1
    %p119 = scmp.ne.s32.totalorder %s114, %s116
    %p120 = scmp.eq.s32.totalorder %s17, 0
    %p121 = por %p119, %p120
    %p122 = scmp.ne.s32.totalorder %s114, %s116
    %p123 = scmp.eq.s32.totalorder %s22, 1
    %p124 = por %p122, %p123
    %p125 = scmp.ne.s32.totalorder %s116, %s117
    %p126 = scmp.eq.s32.totalorder %s22, 0
    %p127 = por %p125, %p126
    %p128 = scmp.ne.s32.totalorder %s116, %s117
    %p129 = scmp.eq.s32.totalorder %s23, 1
    %p130 = por %p128, %p129
    %p132 = scmp.ne.s32.totalorder %s117, %s131
    %p133 = scmp.eq.s32.totalorder %s23, 0
    %p134 = por %p132, %p133
    %s136 = sadd.s32 %s135, 1
    %p139 = scmp.eq.s32.totalorder %s17, 1
    %p140 = scmp.ne.s32.totalorder %s135, %s137
    %p141 = scmp.eq.s32.totalorder %s17, 0
    %p142 = por %p140, %p141
    %p143 = scmp.ne.s32.totalorder %s135, %s137
    %p144 = scmp.eq.s32.totalorder %s22, 1
    %p145 = por %p143, %p144
    %p146 = scmp.ne.s32.totalorder %s137, %s138
    %p147 = scmp.eq.s32.totalorder %s22, 0
    %p148 = por %p146, %p147
    %p149 = scmp.ne.s32.totalorder %s137, %s138
    %p150 = scmp.eq.s32.totalorder %s23, 1
    %p151 = por %p149, %p150
    %p153 = scmp.ne.s32.totalorder %s138, %s152
    %p154 = scmp.eq.s32.totalorder %s23, 0
    %p155 = por %p153, %p154
    %s157 = sadd.s32 %s156, 1
    %p160 = scmp.eq.s32.totalorder %s17, 1
    %p161 = scmp.ne.s32.totalorder %s156, %s158
    %p162 = scmp.eq.s32.totalorder %s17, 0
    %p163 = por %p161, %p162
    %p164 = scmp.ne.s32.totalorder %s156, %s158
    %p165 = scmp.eq.s32.totalorder %s22, 1
    %p166 = por %p164, %p165
    %p167 = scmp.ne.s32.totalorder %s158, %s159
    %p168 = scmp.eq.s32.totalorder %s22, 0
    %p169 = por %p167, %p168
    %p170 = scmp.ne.s32.totalorder %s158, %s159
    %p171 = scmp.eq.s32.totalorder %s23, 1
    %p172 = por %p170, %p171
    %p174 = scmp.ne.s32.totalorder %s159, %s173
    %p175 = scmp.eq.s32.totalorder %s23, 0
    %p176 = por %p174, %p175
    %s177 = ssub.s32 %s17, %s24
    %p178 = scmp.eq.s32.totalorder %s177, 0
    %s180 = sadd.s32 %s179, 1
    %s181 = scalar_select %p178, %s179, %s180
    %p184 = pneg %p178
    %p185 = scmp.eq.s32.totalorder %s17, 1
    %p186 = por %p184, %p185
    %p187 = scmp.ne.s32.totalorder %s179, %s182
    %p188 = scmp.eq.s32.totalorder %s17, 0
    %p189 = por %p187, %p188
    %p190 = scmp.ne.s32.totalorder %s179, %s182
    %p191 = scmp.eq.s32.totalorder %s22, 1
    %p192 = por %p190, %p191
    %p193 = scmp.ne.s32.totalorder %s182, %s183
    %p194 = scmp.eq.s32.totalorder %s22, 0
    %p195 = por %p193, %p194
    %p196 = scmp.ne.s32.totalorder %s182, %s183
    %p197 = scmp.eq.s32.totalorder %s23, 1
    %p198 = por %p196, %p197
    %p200 = scmp.ne.s32.totalorder %s183, %s199
    %p201 = scmp.eq.s32.totalorder %s23, 0
    %p202 = por %p200, %p201
    %s203 = ssub.s32 %s17, %s24
    %p204 = scmp.eq.s32.totalorder %s203, 0
    %s206 = sadd.s32 %s205, 1
    %s207 = scalar_select %p204, %s205, %s206
    %p210 = pneg %p204
    %p211 = scmp.eq.s32.totalorder %s17, 1
    %p212 = por %p210, %p211
    %p213 = scmp.ne.s32.totalorder %s205, %s208
    %p214 = scmp.eq.s32.totalorder %s17, 0
    %p215 = por %p213, %p214
    %p216 = scmp.ne.s32.totalorder %s205, %s208
    %p217 = scmp.eq.s32.totalorder %s22, 1
    %p218 = por %p216, %p217
    %p219 = scmp.ne.s32.totalorder %s208, %s209
    %p220 = scmp.eq.s32.totalorder %s22, 0
    %p221 = por %p219, %p220
    %p222 = scmp.ne.s32.totalorder %s208, %s209
    %p223 = scmp.eq.s32.totalorder %s23, 1
    %p224 = por %p222, %p223
    %p226 = scmp.ne.s32.totalorder %s209, %s225
    %p227 = scmp.eq.s32.totalorder %s23, 0
    %p228 = por %p226, %p227
    %s229 = ssub.s32 %s17, %s24
    %p230 = scmp.eq.s32.totalorder %s229, 0
    %s232 = sadd.s32 %s231, 1
    %s233 = scalar_select %p230, %s231, %s232
    %p236 = pneg %p230
    %p237 = scmp.eq.s32.totalorder %s17, 1
    %p238 = por %p236, %p237
    %p239 = scmp.ne.s32.totalorder %s231, %s234
    %p240 = scmp.eq.s32.totalorder %s17, 0
    %p241 = por %p239, %p240
    %p242 = scmp.ne.s32.totalorder %s231, %s234
    %p243 = scmp.eq.s32.totalorder %s22, 1
    %p244 = por %p242, %p243
    %p245 = scmp.ne.s32.totalorder %s234, %s235
    %p246 = scmp.eq.s32.totalorder %s22, 0
    %p247 = por %p245, %p246
    %p248 = scmp.ne.s32.totalorder %s234, %s235
    %p249 = scmp.eq.s32.totalorder %s23, 1
    %p250 = por %p248, %p249
    %p252 = scmp.ne.s32.totalorder %s235, %s251
    %p253 = scmp.eq.s32.totalorder %s23, 0
    %p254 = por %p252, %p253
    %s255 = ssub.s32 %s17, %s24
    %p256 = scmp.eq.s32.totalorder %s255, 0
    %s258 = sadd.s32 %s257, 1
    %s259 = scalar_select %p256, %s257, %s258
    %p262 = pneg %p256
    %p263 = scmp.eq.s32.totalorder %s17, 1
    %p264 = por %p262, %p263
    %p265 = scmp.ne.s32.totalorder %s257, %s260
    %p266 = scmp.eq.s32.totalorder %s17, 0
    %p267 = por %p265, %p266
    %p268 = scmp.ne.s32.totalorder %s257, %s260
    %p269 = scmp.eq.s32.totalorder %s22, 1
    %p270 = por %p268, %p269
    %p271 = scmp.ne.s32.totalorder %s260, %s261
    %p272 = scmp.eq.s32.totalorder %s22, 0
    %p273 = por %p271, %p272
    %p274 = scmp.ne.s32.totalorder %s260, %s261
    %p275 = scmp.eq.s32.totalorder %s23, 1
    %p276 = por %p274, %p275
    %p278 = scmp.ne.s32.totalorder %s261, %s277
    %p279 = scmp.eq.s32.totalorder %s23, 0
    %p280 = por %p278, %p279
    %p281 = scmp.le.s32.totalorder 1, %s17
    %p282 = scmp.lt.s32.totalorder %s17, 3
    %p283 = pnand %p281, %p282
    %p284 = pneg %p283
    // Predicated region
    $region9: #{spatiotemporal_causal_forward.1} parent=5 // pred_check
      _
    $region10: #{spatiotemporal_causal_forward.1} parent=5 // pred_check_branch
      %286 = sbr.rel (%p283) target = $region12
    $region11: #{spatiotemporal_causal_forward.1} parent=5 // pred_region
      %s287 = ssub.s32 %s17, 1
      // Predicated region
      $region13: #{spatiotemporal_causal_forward.1} parent=11 // pred_check
        %p288 = pneg %p64
      $region14: #{spatiotemporal_causal_forward.1} parent=11 // pred_check_branch
        %290 = sbr.rel (%p288) target = $region16
      $region15: #{spatiotemporal_causal_forward.1} parent=11 // pred_region
        _
      $region16: #{spatiotemporal_causal_forward.1} parent=11 // pred_fallthru
        _
      // Predicated region
      $region17: #{spatiotemporal_causal_forward.1} parent=11 // pred_check
        %p291 = pneg %p85
      $region18: #{spatiotemporal_causal_forward.1} parent=11 // pred_check_branch
        %293 = sbr.rel (%p291) target = $region20
      $region19: #{spatiotemporal_causal_forward.1} parent=11 // pred_region
        _
      $region20: #{spatiotemporal_causal_forward.1} parent=11 // pred_fallthru
        _
      // Predicated region
      $region21: #{spatiotemporal_causal_forward.1} parent=11 // pred_check
        %p294 = pneg %p106
      $region22: #{spatiotemporal_causal_forward.1} parent=11 // pred_check_branch
        %296 = sbr.rel (%p294) target = $region24
      $region23: #{spatiotemporal_causal_forward.1} parent=11 // pred_region
        _
      $region24: #{spatiotemporal_causal_forward.1} parent=11 // pred_fallthru
        _
      // Predicated region
      $region25: #{spatiotemporal_causal_forward.1} parent=11 // pred_check
        %p297 = pneg %p127
      $region26: #{spatiotemporal_causal_forward.1} parent=11 // pred_check_branch
        %299 = sbr.rel (%p297) target = $region28
      $region27: #{spatiotemporal_causal_forward.1} parent=11 // pred_region
        _
      $region28: #{spatiotemporal_causal_forward.1} parent=11 // pred_fallthru
        _
      // Predicated region
      $region29: #{spatiotemporal_causal_forward.1} parent=11 // pred_check
        %p300 = pneg %p148
      $region30: #{spatiotemporal_causal_forward.1} parent=11 // pred_check_branch
        %302 = sbr.rel (%p300) target = $region32
      $region31: #{spatiotemporal_causal_forward.1} parent=11 // pred_region
        _
      $region32: #{spatiotemporal_causal_forward.1} parent=11 // pred_fallthru
        _
      // Predicated region
      $region33: #{spatiotemporal_causal_forward.1} parent=11 // pred_check
        %p303 = pneg %p169
      $region34: #{spatiotemporal_causal_forward.1} parent=11 // pred_check_branch
        %305 = sbr.rel (%p303) target = $region36
      $region35: #{spatiotemporal_causal_forward.1} parent=11 // pred_region
        _
      $region36: #{spatiotemporal_causal_forward.1} parent=11 // pred_fallthru
        _
    $region12: #{spatiotemporal_causal_forward.1} parent=5 // pred_fallthru
      _
    %p306 = scmp.lt.s32.totalorder %s17, 2
    // Predicated region
    $region37: #{spatiotemporal_causal_forward.1} parent=5 // pred_check
      %p307 = pneg %p306
    $region38: #{spatiotemporal_causal_forward.1} parent=5 // pred_check_branch
      %309 = sbr.rel (%p307) target = $region40
    $region39: #{spatiotemporal_causal_forward.1} parent=5 // pred_region
      // Predicated region
      $region41: #{spatiotemporal_causal_forward.1} parent=39 // pred_check
        %p310 = pneg %p37
      $region42: #{spatiotemporal_causal_forward.1} parent=39 // pred_check_branch
        %312 = sbr.rel (%p310) target = $region44
      $region43: #{spatiotemporal_causal_forward.1} parent=39 // pred_region
        %p313 = scmp.lt.s32.totalorder %s17, 1
        %s314 = scalar_select %p313, %s17, 1
        %s315 = smul.addr %s314, 5
        %s316 = smul.addr %s315, 8
        %s317 = scalar_lea.vmem %s0, %s316
      $region44: #{spatiotemporal_causal_forward.1} parent=39 // pred_fallthru
        _
    $region40: #{spatiotemporal_causal_forward.1} parent=5 // pred_fallthru
      _
    %p318 = scmp.le.s32.totalorder 1, %s17
    %p319 = scmp.lt.s32.totalorder %s17, 3
    %p320 = pnand %p318, %p319
    %p321 = pneg %p320
    // Predicated region
    $region45: #{spatiotemporal_causal_forward.1} parent=5 // pred_check
      _
    $region46: #{spatiotemporal_causal_forward.1} parent=5 // pred_check_branch
      %323 = sbr.rel (%p320) target = $region48
    $region47: #{spatiotemporal_causal_forward.1} parent=5 // pred_region
      %s324 = ssub.s32 %s17, 1
      %p325 = scmp.lt.s32.totalorder %s22, 1
      %s326 = scalar_select %p325, %s22, 1
      %s327 = smul.addr %s326, 5
      %s328 = smul.addr %s327, 8
      %s329 = scalar_lea.vmem %s0, %s328
      %p330 = pneg %p43
      %p331 = pneg %p40
      %p332 = pneg %p64
      %p333 = pneg %p61
      %p334 = pneg %p85
      %p335 = pneg %p82
      %p336 = pneg %p106
      %p337 = pneg %p103
      %p338 = pneg %p127
      %p339 = pneg %p124
      %p340 = pneg %p148
      %p341 = pneg %p145
      %p342 = pneg %p169
      %p343 = pneg %p166
      %p344 = pneg %p195
      %p345 = pneg %p192
      %p346 = scmp.lt.s32.totalorder %s22, 1
      %s347 = scalar_select %p346, %s22, 1
      %s348 = smul.addr %s347, 4
      %s349 = smul.addr %s348, 8
      %s350 = scalar_lea.vmem %s7, %s349
      %p351 = pneg %p221
      %p352 = pneg %p218
      %p353 = scmp.lt.s32.totalorder %s22, 1
      %s354 = scalar_select %p353, %s22, 1
      %s355 = smul.addr %s354, 4
      %s356 = smul.addr %s355, 8
      %s357 = scalar_lea.vmem %s8, %s356
      %p358 = pneg %p247
      %p359 = pneg %p244
      %p360 = scmp.lt.s32.totalorder %s22, 1
      %s361 = scalar_select %p360, %s22, 1
      %s362 = smul.addr %s361, 4
      %s363 = smul.addr %s362, 8
      %s364 = scalar_lea.vmem %s9, %s363
      %p365 = pneg %p273
      %p366 = pneg %p270
      %p367 = scmp.lt.s32.totalorder %s22, 1
      %s368 = scalar_select %p367, %s22, 1
      %s369 = smul.addr %s368, 4
      %s370 = smul.addr %s369, 8
      %s371 = scalar_lea.vmem %s10, %s370
      %p372 = scmp.lt.s32.totalorder %s22, 1
      %s373 = scalar_select %p372, %s22, 1
      %s374 = smul.addr %s373, 5
      %s375 = smul.addr %s374, 8
      %s376 = scalar_lea.vmem %s0, %s375
      %p377 = scmp.lt.s32.totalorder %s22, 1
      %s378 = scalar_select %p377, %s22, 1
      %s379 = smul.addr %s378, 4
      %s380 = smul.addr %s379, 8
      %s381 = scalar_lea.vmem %s7, %s380
      %p382 = scmp.lt.s32.totalorder %s22, 1
      %s383 = scalar_select %p382, %s22, 1
      %s384 = smul.addr %s383, 4
      %s385 = smul.addr %s384, 8
      %s386 = scalar_lea.vmem %s8, %s385
      %p387 = scmp.lt.s32.totalorder %s22, 1
      %s388 = scalar_select %p387, %s22, 1
      %s389 = smul.addr %s388, 4
      %s390 = smul.addr %s389, 8
      %s391 = scalar_lea.vmem %s9, %s390
      %p392 = scmp.lt.s32.totalorder %s22, 1
      %s393 = scalar_select %p392, %s22, 1
      %s394 = smul.addr %s393, 4
      %s395 = smul.addr %s394, 8
      %s396 = scalar_lea.vmem %s10, %s395
      %v398 = vld [vmem:[%s376] sm:$0xff]
      %v399 = vld [vmem:[%s376 + $0x8] sm:$0xff]
      %v400 = vld [vmem:[%s376 + $0x10] sm:$0xff]
      %v401 = vld [vmem:[%s376 + $0x18] sm:$0xff]
      %v402 = vpack.c.bf16 %v399, %v398
      %v403 = vpack.c.bf16 %v401, %v400
      %v404 = vld [vmem:[%s1] sm:$0xf]
      %v405 = vld [vmem:[%s1 + $0x4] sm:$0xf]
      %v406 = vld [vmem:[%s1 + $0x8] sm:$0xf]
      %v407 = vld [vmem:[%s1 + $0xc] sm:$0xf]
      %v408 = vld [vmem:[%s376 + $0x1] sm:$0xff]
      %v409 = vld [vmem:[%s376 + $0x9] sm:$0xff]
      %v410 = vld [vmem:[%s376 + $0x11] sm:$0xff]
      %v411 = vld [vmem:[%s376 + $0x19] sm:$0xff]
      %v412 = vpack.c.bf16 %v409, %v408
      %v413 = vpack.c.bf16 %v411, %v410
      %s414 = scalar_lea.vmem %s1, 16
      %v415 = vld [vmem:[%s414] sm:$0xf]
      %v416 = vld [vmem:[%s414 + $0x4] sm:$0xf]
      %v417 = vld [vmem:[%s414 + $0x8] sm:$0xf]
      %v418 = vld [vmem:[%s414 + $0xc] sm:$0xf]
      %v423 = vunpack.c.l.b16 %v415
      %v424 = vunpack.c.l.b16 %v416
      %v425 = vunpack.c.l.b16 %v417
      %v426 = vunpack.c.l.b16 %v418
      %v427 = vpack.c.b16 %v424, %v423
      %v428 = vpack.c.b16 %v426, %v425
      %vm431 = vcmask 261120
      %v433 = vsel %vm431, %v412, 0
      %v436 = vsel %vm431, %v413, 0
      %438 = vmatprep.subr.bf16.mxu0 0
      %439 = vmatpush1.bf16.msra.mxu0 0
      %440 = vmatprep.subr.bf16.mxu0 0
      %441 = vmatpush1.bf16.msra.mxu0 0
      %442 = vmatprep.subr.bf16.mxu0 0
      %443 = vmatpush1.bf16.msra.mxu0 0
      %444 = vmatprep.subr.bf16.mxu0 0
      %445 = vmatpush1.bf16.msra.mxu0 0
      %446 = vmatprep.subr.bf16.mxu0 0
      %447 = vmatpush1.bf16.msra.mxu0 0
      %448 = vmatprep.subr.bf16.mxu0 0
      %449 = vmatpush1.bf16.msra.mxu0 0
      %450 = vmatprep.subr.bf16.mxu0 0
      %451 = vmatpush1.bf16.msra.mxu0 %v428
      %452 = vmatprep.subr.bf16.mxu0 0
      %453 = vmatpush1.bf16.msra.mxu0 %v427
      %454 = vmatprep.subr.bf16.mxu0 0
      %455 = vmatpush2.bf16.msra.mxu0 0
      %456 = vmatprep.subr.bf16.mxu0 0
      %457 = vmatpush2.bf16.msra.mxu0 0
      %458 = vmatprep.subr.bf16.mxu0 0
      %459 = vmatpush2.bf16.msra.mxu0 0
      %460 = vmatprep.subr.bf16.mxu0 0
      %461 = vmatpush2.bf16.msra.mxu0 0
      %462 = vmatprep.subr.bf16.mxu0 0
      %463 = vmatpush2.bf16.msra.mxu0 0
      %464 = vmatprep.subr.bf16.mxu0 0
      %465 = vmatpush2.bf16.msra.mxu0 0
      %466 = vmatprep.subr.bf16.mxu0 0
      %467 = vmatpush2.bf16.msra.mxu0 0
      %468 = vmatprep.subr.bf16.mxu0 0
      %469 = vmatpush2.bf16.msra.mxu0 0
      %470 = vmatprep.mubr.bf16.mxu0 0
      %471 = vmatmul.mubr.bf16.gmra.mxu0 %v433
      %v472 = vpop.f32.mrf.mxu0
      %v473 = vadd.f32 0.0, %v472
      %v474 = vpop.f32.mrf.mxu0
      %v475 = vpop.f32.mrf.mxu0
      %v476 = vadd.f32 0.0, %v475
      %v477 = vpop.f32.mrf.mxu0
      %478 = vmatprep.mubr.bf16.mxu0 0
      %479 = vmatmul.mubr.bf16.gmra.mxu0 %v436
      %v480 = vpop.f32.mrf.mxu0
      %v481 = vadd.f32 0.0, %v480
      %v482 = vpop.f32.mrf.mxu0
      %v483 = vpop.f32.mrf.mxu0
      %v484 = vadd.f32 0.0, %v483
      %v485 = vpop.f32.mrf.mxu0
      %486 = vdwg.mxu0
      %v491 = vunpack.c.l.b16 %v404
      %v492 = vunpack.c.l.b16 %v405
      %v493 = vunpack.c.l.b16 %v406
      %v494 = vunpack.c.l.b16 %v407
      %v495 = vpack.c.b16 %v492, %v491
      %v496 = vpack.c.b16 %v494, %v493
      %v500 = vsel %vm431, %v402, 0
      %v503 = vsel %vm431, %v403, 0
      %505 = vmatprep.subr.bf16.mxu0 0
      %506 = vmatpush1.bf16.msra.mxu0 0
      %507 = vmatprep.subr.bf16.mxu0 0
      %508 = vmatpush1.bf16.msra.mxu0 0
      %509 = vmatprep.subr.bf16.mxu0 0
      %510 = vmatpush1.bf16.msra.mxu0 0
      %511 = vmatprep.subr.bf16.mxu0 0
      %512 = vmatpush1.bf16.msra.mxu0 0
      %513 = vmatprep.subr.bf16.mxu0 0
      %514 = vmatpush1.bf16.msra.mxu0 0
      %515 = vmatprep.subr.bf16.mxu0 0
      %516 = vmatpush1.bf16.msra.mxu0 0
      %517 = vmatprep.subr.bf16.mxu0 0
      %518 = vmatpush1.bf16.msra.mxu0 %v496
      %519 = vmatprep.subr.bf16.mxu0 0
      %520 = vmatpush1.bf16.msra.mxu0 %v495
      %521 = vmatprep.subr.bf16.mxu0 0
      %522 = vmatpush2.bf16.msra.mxu0 0
      %523 = vmatprep.subr.bf16.mxu0 0
      %524 = vmatpush2.bf16.msra.mxu0 0
      %525 = vmatprep.subr.bf16.mxu0 0
      %526 = vmatpush2.bf16.msra.mxu0 0
      %527 = vmatprep.subr.bf16.mxu0 0
      %528 = vmatpush2.bf16.msra.mxu0 0
      %529 = vmatprep.subr.bf16.mxu0 0
      %530 = vmatpush2.bf16.msra.mxu0 0
      %531 = vmatprep.subr.bf16.mxu0 0
      %532 = vmatpush2.bf16.msra.mxu0 0
      %533 = vmatprep.subr.bf16.mxu0 0
      %534 = vmatpush2.bf16.msra.mxu0 0
      %535 = vmatprep.subr.bf16.mxu0 0
      %536 = vmatpush2.bf16.msra.mxu0 0
      %537 = vmatprep.mubr.bf16.mxu0 0
      %538 = vmatmul.mubr.bf16.gmra.mxu0 %v500
      %v539 = vpop.f32.mrf.mxu0
      %v540 = vadd.f32 %v473, %v539
      %v541 = vpop.f32.mrf.mxu0
      %v542 = vpop.f32.mrf.mxu0
      %v543 = vadd.f32 %v476, %v542
      %v544 = vpop.f32.mrf.mxu0
      %545 = vmatprep.mubr.bf16.mxu0 0
      %546 = vmatmul.mubr.bf16.gmra.mxu0 %v503
      %v547 = vpop.f32.mrf.mxu0
      %v548 = vadd.f32 %v481, %v547
      %v549 = vpop.f32.mrf.mxu0
      %v550 = vpop.f32.mrf.mxu0
      %v551 = vadd.f32 %v484, %v550
      %v552 = vpop.f32.mrf.mxu0
      %553 = vdwg.mxu0
      %v554 = vld [vmem:[%s376 + $0x2] sm:$0xff]
      %v555 = vld [vmem:[%s376 + $0xa] sm:$0xff]
      %v556 = vld [vmem:[%s376 + $0x12] sm:$0xff]
      %v557 = vld [vmem:[%s376 + $0x1a] sm:$0xff]
      %v558 = vpack.c.bf16 %v555, %v554
      %v559 = vpack.c.bf16 %v557, %v556
      %s560 = scalar_lea.vmem %s1, 32
      %v561 = vld [vmem:[%s560] sm:$0xf]
      %v562 = vld [vmem:[%s560 + $0x4] sm:$0xf]
      %v563 = vld [vmem:[%s560 + $0x8] sm:$0xf]
      %v564 = vld [vmem:[%s560 + $0xc] sm:$0xf]
      %v569 = vunpack.c.l.b16 %v561
      %v570 = vunpack.c.l.b16 %v562
      %v571 = vunpack.c.l.b16 %v563
      %v572 = vunpack.c.l.b16 %v564
      %v573 = vpack.c.b16 %v570, %v569
      %v574 = vpack.c.b16 %v572, %v571
      %v578 = vsel %vm431, %v558, 0
      %v581 = vsel %vm431, %v559, 0
      %583 = vmatprep.subr.bf16.mxu0 0
      %584 = vmatpush1.bf16.msra.mxu0 0
      %585 = vmatprep.subr.bf16.mxu0 0
      %586 = vmatpush1.bf16.msra.mxu0 0
      %587 = vmatprep.subr.bf16.mxu0 0
      %588 = vmatpush1.bf16.msra.mxu0 0
      %589 = vmatprep.subr.bf16.mxu0 0
      %590 = vmatpush1.bf16.msra.mxu0 0
      %591 = vmatprep.subr.bf16.mxu0 0
      %592 = vmatpush1.bf16.msra.mxu0 0
      %593 = vmatprep.subr.bf16.mxu0 0
      %594 = vmatpush1.bf16.msra.mxu0 0
      %595 = vmatprep.subr.bf16.mxu0 0
      %596 = vmatpush1.bf16.msra.mxu0 %v574
      %597 = vmatprep.subr.bf16.mxu0 0
      %598 = vmatpush1.bf16.msra.mxu0 %v573
      %599 = vmatprep.subr.bf16.mxu0 0
      %600 = vmatpush2.bf16.msra.mxu0 0
      %601 = vmatprep.subr.bf16.mxu0 0
      %602 = vmatpush2.bf16.msra.mxu0 0
      %603 = vmatprep.subr.bf16.mxu0 0
      %604 = vmatpush2.bf16.msra.mxu0 0
      %605 = vmatprep.subr.bf16.mxu0 0
      %606 = vmatpush2.bf16.msra.mxu0 0
      %607 = vmatprep.subr.bf16.mxu0 0
      %608 = vmatpush2.bf16.msra.mxu0 0
      %609 = vmatprep.subr.bf16.mxu0 0
      %610 = vmatpush2.bf16.msra.mxu0 0
      %611 = vmatprep.subr.bf16.mxu0 0
      %612 = vmatpush2.bf16.msra.mxu0 0
      %613 = vmatprep.subr.bf16.mxu0 0
      %614 = vmatpush2.bf16.msra.mxu0 0
      %615 = vmatprep.mubr.bf16.mxu0 0
      %616 = vmatmul.mubr.bf16.gmra.mxu0 %v578
      %v617 = vpop.f32.mrf.mxu0
      %v618 = vadd.f32 0.0, %v617
      %v619 = vpop.f32.mrf.mxu0
      %v620 = vpop.f32.mrf.mxu0
      %v621 = vadd.f32 0.0, %v620
      %v622 = vpop.f32.mrf.mxu0
      %623 = vmatprep.mubr.bf16.mxu0 0
      %624 = vmatmul.mubr.bf16.gmra.mxu0 %v581
      %v625 = vpop.f32.mrf.mxu0
      %v626 = vadd.f32 0.0, %v625
      %v627 = vpop.f32.mrf.mxu0
      %v628 = vpop.f32.mrf.mxu0
      %v629 = vadd.f32 0.0, %v628
      %v630 = vpop.f32.mrf.mxu0
      %631 = vdwg.mxu0
      %v632 = vadd.f32 %v540, %v618
      %v633 = vadd.f32 %v543, %v621
      %v634 = vadd.f32 %v548, %v626
      %v635 = vadd.f32 %v551, %v629
      %v636 = vld [vmem:[%s2] sm:$0x1]
      %v638 = vlaneseq
      %v639 = vshrl.u32 %v638, 7
      %v640 = vsub.s32 0, %v639
      %v641 = vrot.slane %v636, %v640
      %v643 = vadd.f32 %v632, %v641
      %v644 = vadd.f32 %v633, %v641
      %v645 = vadd.f32 %v634, %v641
      %v646 = vadd.f32 %v635, %v641
      %v647 = vmax.f32 %v643, 0.0
      %v648 = vmax.f32 %v644, 0.0
      %v649 = vmax.f32 %v645, 0.0
      %v650 = vmax.f32 %v646, 0.0
      %651 = vst [vmem:[%s391] sm:$0xff] %v647
      %652 = vst [vmem:[%s391 + $0x8] sm:$0xff] %v648
      %653 = vst [vmem:[%s391 + $0x10] sm:$0xff] %v649
      %654 = vst [vmem:[%s391 + $0x18] sm:$0xff] %v650
      %655 = vst [vmem:[#allocation2 + $0x1] sm:$0xff] %v647
      %656 = vst [vmem:[#allocation2 + $0x9] sm:$0xff] %v648
      %657 = vst [vmem:[#allocation2 + $0x11] sm:$0xff] %v649
      %658 = vst [vmem:[#allocation2 + $0x19] sm:$0xff] %v650
      %659 = vst [vmem:[#allocation2] sm:$0x1] 0.0
      %660 = vst [vmem:[#allocation2 + $0x21] sm:$0x1] 0.0
      %v661 = vld [vmem:[#allocation2] sm:$0xff]
      %v662 = vld [vmem:[#allocation2 + $0x8] sm:$0xff]
      %v663 = vld [vmem:[#allocation2 + $0x10] sm:$0xff]
      %v664 = vld [vmem:[#allocation2 + $0x18] sm:$0xff]
      %v665 = vpack.c.bf16 %v662, %v661
      %v666 = vpack.c.bf16 %v664, %v663
      %v667 = vld [vmem:[%s3] sm:$0xf]
      %v668 = vld [vmem:[%s3 + $0x4] sm:$0xf]
      %v669 = vld [vmem:[%s3 + $0x8] sm:$0xf]
      %v670 = vld [vmem:[%s3 + $0xc] sm:$0xf]
      %v671 = vld [vmem:[%s3 + $0x10] sm:$0xf]
      %v672 = vld [vmem:[%s3 + $0x14] sm:$0xf]
      %v673 = vld [vmem:[%s3 + $0x18] sm:$0xf]
      %v674 = vld [vmem:[%s3 + $0x1c] sm:$0xf]
      %v675 = vld [vmem:[%s3 + $0x20] sm:$0xf]
      %v676 = vld [vmem:[%s3 + $0x24] sm:$0xf]
      %v677 = vld [vmem:[%s3 + $0x28] sm:$0xf]
      %v678 = vld [vmem:[%s3 + $0x2c] sm:$0xf]
      %v679 = vld [vmem:[%s3 + $0x30] sm:$0xf]
      %v680 = vld [vmem:[%s3 + $0x34] sm:$0xf]
      %v681 = vld [vmem:[%s3 + $0x38] sm:$0xf]
      %v682 = vld [vmem:[%s3 + $0x3c] sm:$0xf]
      %v683 = vld [vmem:[#allocation2 + $0x1] sm:$0xff]
      %v684 = vld [vmem:[#allocation2 + $0x9] sm:$0xff]
      %v685 = vld [vmem:[#allocation2 + $0x11] sm:$0xff]
      %v686 = vld [vmem:[#allocation2 + $0x19] sm:$0xff]
      %v687 = vpack.c.bf16 %v684, %v683
      %v688 = vpack.c.bf16 %v686, %v685
      %s689 = scalar_lea.vmem %s3, 64
      %v690 = vld [vmem:[%s689] sm:$0xf]
      %v691 = vld [vmem:[%s689 + $0x4] sm:$0xf]
      %v692 = vld [vmem:[%s689 + $0x8] sm:$0xf]
      %v693 = vld [vmem:[%s689 + $0xc] sm:$0xf]
      %v694 = vld [vmem:[%s689 + $0x10] sm:$0xf]
      %v695 = vld [vmem:[%s689 + $0x14] sm:$0xf]
      %v696 = vld [vmem:[%s689 + $0x18] sm:$0xf]
      %v697 = vld [vmem:[%s689 + $0x1c] sm:$0xf]
      %v698 = vld [vmem:[%s689 + $0x20] sm:$0xf]
      %v699 = vld [vmem:[%s689 + $0x24] sm:$0xf]
      %v700 = vld [vmem:[%s689 + $0x28] sm:$0xf]
      %v701 = vld [vmem:[%s689 + $0x2c] sm:$0xf]
      %v702 = vld [vmem:[%s689 + $0x30] sm:$0xf]
      %v703 = vld [vmem:[%s689 + $0x34] sm:$0xf]
      %v704 = vld [vmem:[%s689 + $0x38] sm:$0xf]
      %v705 = vld [vmem:[%s689 + $0x3c] sm:$0xf]
      %v722 = vunpack.c.l.b16 %v690
      %v723 = vunpack.c.l.b16 %v691
      %v724 = vunpack.c.l.b16 %v692
      %v725 = vunpack.c.l.b16 %v693
      %v726 = vunpack.c.l.b16 %v694
      %v727 = vunpack.c.l.b16 %v695
      %v728 = vunpack.c.l.b16 %v696
      %v729 = vunpack.c.l.b16 %v697
      %v730 = vunpack.c.l.b16 %v698
      %v731 = vunpack.c.l.b16 %v699
      %v732 = vunpack.c.l.b16 %v700
      %v733 = vunpack.c.l.b16 %v701
      %v734 = vunpack.c.l.b16 %v702
      %v735 = vunpack.c.l.b16 %v703
      %v736 = vunpack.c.l.b16 %v704
      %v737 = vunpack.c.l.b16 %v705
      %v738 = vpack.c.b16 %v723, %v722
      %v739 = vpack.c.b16 %v725, %v724
      %v740 = vpack.c.b16 %v727, %v726
      %v741 = vpack.c.b16 %v729, %v728
      %v742 = vpack.c.b16 %v731, %v730
      %v743 = vpack.c.b16 %v733, %v732
      %v744 = vpack.c.b16 %v735, %v734
      %v745 = vpack.c.b16 %v737, %v736
      %754 = vmatprep.subr.bf16.mxu0 0
      %755 = vmatpush1.bf16.msra.mxu0 %v745
      %756 = vmatprep.subr.bf16.mxu0 0
      %757 = vmatpush1.bf16.msra.mxu0 %v744
      %758 = vmatprep.subr.bf16.mxu0 0
      %759 = vmatpush1.bf16.msra.mxu0 %v743
      %760 = vmatprep.subr.bf16.mxu0 0
      %761 = vmatpush1.bf16.msra.mxu0 %v742
      %762 = vmatprep.subr.bf16.mxu0 0
      %763 = vmatpush1.bf16.msra.mxu0 %v741
      %764 = vmatprep.subr.bf16.mxu0 0
      %765 = vmatpush1.bf16.msra.mxu0 %v740
      %766 = vmatprep.subr.bf16.mxu0 0
      %767 = vmatpush1.bf16.msra.mxu0 %v739
      %768 = vmatprep.subr.bf16.mxu0 0
      %769 = vmatpush1.bf16.msra.mxu0 %v738
      %770 = vmatprep.subr.bf16.mxu0 0
      %771 = vmatpush2.bf16.msra.mxu0 0
      %772 = vmatprep.subr.bf16.mxu0 0
      %773 = vmatpush2.bf16.msra.mxu0 0
      %774 = vmatprep.subr.bf16.mxu0 0
      %775 = vmatpush2.bf16.msra.mxu0 0
      %776 = vmatprep.subr.bf16.mxu0 0
      %777 = vmatpush2.bf16.msra.mxu0 0
      %778 = vmatprep.subr.bf16.mxu0 0
      %779 = vmatpush2.bf16.msra.mxu0 0
      %780 = vmatprep.subr.bf16.mxu0 0
      %781 = vmatpush2.bf16.msra.mxu0 0
      %782 = vmatprep.subr.bf16.mxu0 0
      %783 = vmatpush2.bf16.msra.mxu0 0
      %784 = vmatprep.subr.bf16.mxu0 0
      %785 = vmatpush2.bf16.msra.mxu0 0
      %786 = vmatprep.mubr.bf16.mxu0 0
      %787 = vmatmul.mubr.bf16.gmra.mxu0 %v687
      %v788 = vpop.f32.mrf.mxu0
      %v789 = vadd.f32 0.0, %v788
      %v790 = vpop.f32.mrf.mxu0
      %v791 = vpop.f32.mrf.mxu0
      %v792 = vadd.f32 0.0, %v791
      %v793 = vpop.f32.mrf.mxu0
      %794 = vmatprep.mubr.bf16.mxu0 0
      %795 = vmatmul.mubr.bf16.gmra.mxu0 %v688
      %v796 = vpop.f32.mrf.mxu0
      %v797 = vadd.f32 0.0, %v796
      %v798 = vpop.f32.mrf.mxu0
      %v799 = vpop.f32.mrf.mxu0
      %v800 = vadd.f32 0.0, %v799
      %v801 = vpop.f32.mrf.mxu0
      %802 = vdwg.mxu0
      %v819 = vunpack.c.l.b16 %v667
      %v820 = vunpack.c.l.b16 %v668
      %v821 = vunpack.c.l.b16 %v669
      %v822 = vunpack.c.l.b16 %v670
      %v823 = vunpack.c.l.b16 %v671
      %v824 = vunpack.c.l.b16 %v672
      %v825 = vunpack.c.l.b16 %v673
      %v826 = vunpack.c.l.b16 %v674
      %v827 = vunpack.c.l.b16 %v675
      %v828 = vunpack.c.l.b16 %v676
      %v829 = vunpack.c.l.b16 %v677
      %v830 = vunpack.c.l.b16 %v678
      %v831 = vunpack.c.l.b16 %v679
      %v832 = vunpack.c.l.b16 %v680
      %v833 = vunpack.c.l.b16 %v681
      %v834 = vunpack.c.l.b16 %v682
      %v835 = vpack.c.b16 %v820, %v819
      %v836 = vpack.c.b16 %v822, %v821
      %v837 = vpack.c.b16 %v824, %v823
      %v838 = vpack.c.b16 %v826, %v825
      %v839 = vpack.c.b16 %v828, %v827
      %v840 = vpack.c.b16 %v830, %v829
      %v841 = vpack.c.b16 %v832, %v831
      %v842 = vpack.c.b16 %v834, %v833
      %851 = vmatprep.subr.bf16.mxu0 0
      %852 = vmatpush1.bf16.msra.mxu0 %v842
      %853 = vmatprep.subr.bf16.mxu0 0
      %854 = vmatpush1.bf16.msra.mxu0 %v841
      %855 = vmatprep.subr.bf16.mxu0 0
      %856 = vmatpush1.bf16.msra.mxu0 %v840
      %857 = vmatprep.subr.bf16.mxu0 0
      %858 = vmatpush1.bf16.msra.mxu0 %v839
      %859 = vmatprep.subr.bf16.mxu0 0
      %860 = vmatpush1.bf16.msra.mxu0 %v838
      %861 = vmatprep.subr.bf16.mxu0 0
      %862 = vmatpush1.bf16.msra.mxu0 %v837
      %863 = vmatprep.subr.bf16.mxu0 0
      %864 = vmatpush1.bf16.msra.mxu0 %v836
      %865 = vmatprep.subr.bf16.mxu0 0
      %866 = vmatpush1.bf16.msra.mxu0 %v835
      %867 = vmatprep.subr.bf16.mxu0 0
      %868 = vmatpush2.bf16.msra.mxu0 0
      %869 = vmatprep.subr.bf16.mxu0 0
      %870 = vmatpush2.bf16.msra.mxu0 0
      %871 = vmatprep.subr.bf16.mxu0 0
      %872 = vmatpush2.bf16.msra.mxu0 0
      %873 = vmatprep.subr.bf16.mxu0 0
      %874 = vmatpush2.bf16.msra.mxu0 0
      %875 = vmatprep.subr.bf16.mxu0 0
      %876 = vmatpush2.bf16.msra.mxu0 0
      %877 = vmatprep.subr.bf16.mxu0 0
      %878 = vmatpush2.bf16.msra.mxu0 0
      %879 = vmatprep.subr.bf16.mxu0 0
      %880 = vmatpush2.bf16.msra.mxu0 0
      %881 = vmatprep.subr.bf16.mxu0 0
      %882 = vmatpush2.bf16.msra.mxu0 0
      %883 = vmatprep.mubr.bf16.mxu0 0
      %884 = vmatmul.mubr.bf16.gmra.mxu0 %v665
      %v885 = vpop.f32.mrf.mxu0
      %v886 = vadd.f32 %v789, %v885
      %v887 = vpop.f32.mrf.mxu0
      %v888 = vpop.f32.mrf.mxu0
      %v889 = vadd.f32 %v792, %v888
      %v890 = vpop.f32.mrf.mxu0
      %891 = vmatprep.mubr.bf16.mxu0 0
      %892 = vmatmul.mubr.bf16.gmra.mxu0 %v666
      %v893 = vpop.f32.mrf.mxu0
      %v894 = vadd.f32 %v797, %v893
      %v895 = vpop.f32.mrf.mxu0
      %v896 = vpop.f32.mrf.mxu0
      %v897 = vadd.f32 %v800, %v896
      %v898 = vpop.f32.mrf.mxu0
      %899 = vdwg.mxu0
      %v900 = vld [vmem:[#allocation2 + $0x2] sm:$0xff]
      %v901 = vld [vmem:[#allocation2 + $0xa] sm:$0xff]
      %v902 = vld [vmem:[#allocation2 + $0x12] sm:$0xff]
      %v903 = vld [vmem:[#allocation2 + $0x1a] sm:$0xff]
      %v904 = vpack.c.bf16 %v901, %v900
      %v905 = vpack.c.bf16 %v903, %v902
      %s906 = scalar_lea.vmem %s3, 128
      %v907 = vld [vmem:[%s906] sm:$0xf]
      %v908 = vld [vmem:[%s906 + $0x4] sm:$0xf]
      %v909 = vld [vmem:[%s906 + $0x8] sm:$0xf]
      %v910 = vld [vmem:[%s906 + $0xc] sm:$0xf]
      %v911 = vld [vmem:[%s906 + $0x10] sm:$0xf]
      %v912 = vld [vmem:[%s906 + $0x14] sm:$0xf]
      %v913 = vld [vmem:[%s906 + $0x18] sm:$0xf]
      %v914 = vld [vmem:[%s906 + $0x1c] sm:$0xf]
      %v915 = vld [vmem:[%s906 + $0x20] sm:$0xf]
      %v916 = vld [vmem:[%s906 + $0x24] sm:$0xf]
      %v917 = vld [vmem:[%s906 + $0x28] sm:$0xf]
      %v918 = vld [vmem:[%s906 + $0x2c] sm:$0xf]
      %v919 = vld [vmem:[%s906 + $0x30] sm:$0xf]
      %v920 = vld [vmem:[%s906 + $0x34] sm:$0xf]
      %v921 = vld [vmem:[%s906 + $0x38] sm:$0xf]
      %v922 = vld [vmem:[%s906 + $0x3c] sm:$0xf]
      %v939 = vunpack.c.l.b16 %v907
      %v940 = vunpack.c.l.b16 %v908
      %v941 = vunpack.c.l.b16 %v909
      %v942 = vunpack.c.l.b16 %v910
      %v943 = vunpack.c.l.b16 %v911
      %v944 = vunpack.c.l.b16 %v912
      %v945 = vunpack.c.l.b16 %v913
      %v946 = vunpack.c.l.b16 %v914
      %v947 = vunpack.c.l.b16 %v915
      %v948 = vunpack.c.l.b16 %v916
      %v949 = vunpack.c.l.b16 %v917
      %v950 = vunpack.c.l.b16 %v918
      %v951 = vunpack.c.l.b16 %v919
      %v952 = vunpack.c.l.b16 %v920
      %v953 = vunpack.c.l.b16 %v921
      %v954 = vunpack.c.l.b16 %v922
      %v955 = vpack.c.b16 %v940, %v939
      %v956 = vpack.c.b16 %v942, %v941
      %v957 = vpack.c.b16 %v944, %v943
      %v958 = vpack.c.b16 %v946, %v945
      %v959 = vpack.c.b16 %v948, %v947
      %v960 = vpack.c.b16 %v950, %v949
      %v961 = vpack.c.b16 %v952, %v951
      %v962 = vpack.c.b16 %v954, %v953
      %971 = vmatprep.subr.bf16.mxu0 0
      %972 = vmatpush1.bf16.msra.mxu0 %v962
      %973 = vmatprep.subr.bf16.mxu0 0
      %974 = vmatpush1.bf16.msra.mxu0 %v961
      %975 = vmatprep.subr.bf16.mxu0 0
      %976 = vmatpush1.bf16.msra.mxu0 %v960
      %977 = vmatprep.subr.bf16.mxu0 0
      %978 = vmatpush1.bf16.msra.mxu0 %v959
      %979 = vmatprep.subr.bf16.mxu0 0
      %980 = vmatpush1.bf16.msra.mxu0 %v958
      %981 = vmatprep.subr.bf16.mxu0 0
      %982 = vmatpush1.bf16.msra.mxu0 %v957
      %983 = vmatprep.subr.bf16.mxu0 0
      %984 = vmatpush1.bf16.msra.mxu0 %v956
      %985 = vmatprep.subr.bf16.mxu0 0
      %986 = vmatpush1.bf16.msra.mxu0 %v955
      %987 = vmatprep.subr.bf16.mxu0 0
      %988 = vmatpush2.bf16.msra.mxu0 0
      %989 = vmatprep.subr.bf16.mxu0 0
      %990 = vmatpush2.bf16.msra.mxu0 0
      %991 = vmatprep.subr.bf16.mxu0 0
      %992 = vmatpush2.bf16.msra.mxu0 0
      %993 = vmatprep.subr.bf16.mxu0 0
      %994 = vmatpush2.bf16.msra.mxu0 0
      %995 = vmatprep.subr.bf16.mxu0 0
      %996 = vmatpush2.bf16.msra.mxu0 0
      %997 = vmatprep.subr.bf16.mxu0 0
      %998 = vmatpush2.bf16.msra.mxu0 0
      %999 = vmatprep.subr.bf16.mxu0 0
      %1000 = vmatpush2.bf16.msra.mxu0 0
      %1001 = vmatprep.subr.bf16.mxu0 0
      %1002 = vmatpush2.bf16.msra.mxu0 0
      %1003 = vmatprep.mubr.bf16.mxu0 0
      %1004 = vmatmul.mubr.bf16.gmra.mxu0 %v904
      %v1005 = vpop.f32.mrf.mxu0
      %v1006 = vadd.f32 0.0, %v1005
      %v1007 = vpop.f32.mrf.mxu0
      %v1008 = vpop.f32.mrf.mxu0
      %v1009 = vadd.f32 0.0, %v1008
      %v1010 = vpop.f32.mrf.mxu0
      %1011 = vmatprep.mubr.bf16.mxu0 0
      %1012 = vmatmul.mubr.bf16.gmra.mxu0 %v905
      %v1013 = vpop.f32.mrf.mxu0
      %v1014 = vadd.f32 0.0, %v1013
      %v1015 = vpop.f32.mrf.mxu0
      %v1016 = vpop.f32.mrf.mxu0
      %v1017 = vadd.f32 0.0, %v1016
      %v1018 = vpop.f32.mrf.mxu0
      %1019 = vdwg.mxu0
      %v1020 = vadd.f32 %v886, %v1006
      %v1021 = vadd.f32 %v889, %v1009
      %v1022 = vadd.f32 %v894, %v1014
      %v1023 = vadd.f32 %v897, %v1017
      %v1024 = vld [vmem:[%s4] sm:$0x1]
      %v1026 = vlaneseq
      %v1027 = vshrl.u32 %v1026, 7
      %v1028 = vsub.s32 0, %v1027
      %v1029 = vrot.slane %v1024, %v1028
      %v1031 = vadd.f32 %v1020, %v1029
      %v1032 = vadd.f32 %v1021, %v1029
      %v1033 = vadd.f32 %v1022, %v1029
      %v1034 = vadd.f32 %v1023, %v1029
      %v1035 = vmax.f32 %v1031, 0.0
      %v1036 = vmax.f32 %v1032, 0.0
      %v1037 = vmax.f32 %v1033, 0.0
      %v1038 = vmax.f32 %v1034, 0.0
      %1039 = vst [vmem:[%s396] sm:$0xff] %v1035
      %1040 = vst [vmem:[%s396 + $0x8] sm:$0xff] %v1036
      %1041 = vst [vmem:[%s396 + $0x10] sm:$0xff] %v1037
      %1042 = vst [vmem:[%s396 + $0x18] sm:$0xff] %v1038
      %v1043 = vpack.c.bf16 %v1036, %v1035
      %v1044 = vpack.c.bf16 %v1038, %v1037
      %v1045 = vld [vmem:[%s5] sm:$0xf]
      %v1046 = vld [vmem:[%s5 + $0x4] sm:$0xf]
      %v1047 = vld [vmem:[%s5 + $0x8] sm:$0xf]
      %v1048 = vld [vmem:[%s5 + $0xc] sm:$0xf]
      %v1049 = vld [vmem:[%s5 + $0x10] sm:$0xf]
      %v1050 = vld [vmem:[%s5 + $0x14] sm:$0xf]
      %v1051 = vld [vmem:[%s5 + $0x18] sm:$0xf]
      %v1052 = vld [vmem:[%s5 + $0x1c] sm:$0xf]
      %v1053 = vld [vmem:[%s5 + $0x20] sm:$0xf]
      %v1054 = vld [vmem:[%s5 + $0x24] sm:$0xf]
      %v1055 = vld [vmem:[%s5 + $0x28] sm:$0xf]
      %v1056 = vld [vmem:[%s5 + $0x2c] sm:$0xf]
      %v1057 = vld [vmem:[%s5 + $0x30] sm:$0xf]
      %v1058 = vld [vmem:[%s5 + $0x34] sm:$0xf]
      %v1059 = vld [vmem:[%s5 + $0x38] sm:$0xf]
      %v1060 = vld [vmem:[%s5 + $0x3c] sm:$0xf]
      %v1061 = vld [vmem:[%s6] sm:$0x1]
      %v1063 = vlaneseq
      %v1064 = vshrl.u32 %v1063, 7
      %v1065 = vsub.s32 0, %v1064
      %v1066 = vrot.slane %v1061, %v1065
      %v1084 = vunpack.c.l.b16 %v1045
      %v1085 = vunpack.c.l.b16 %v1046
      %v1086 = vunpack.c.l.b16 %v1047
      %v1087 = vunpack.c.l.b16 %v1048
      %v1088 = vunpack.c.l.b16 %v1049
      %v1089 = vunpack.c.l.b16 %v1050
      %v1090 = vunpack.c.l.b16 %v1051
      %v1091 = vunpack.c.l.b16 %v1052
      %v1092 = vunpack.c.l.b16 %v1053
      %v1093 = vunpack.c.l.b16 %v1054
      %v1094 = vunpack.c.l.b16 %v1055
      %v1095 = vunpack.c.l.b16 %v1056
      %v1096 = vunpack.c.l.b16 %v1057
      %v1097 = vunpack.c.l.b16 %v1058
      %v1098 = vunpack.c.l.b16 %v1059
      %v1099 = vunpack.c.l.b16 %v1060
      %v1100 = vpack.c.b16 %v1085, %v1084
      %v1101 = vpack.c.b16 %v1087, %v1086
      %v1102 = vpack.c.b16 %v1089, %v1088
      %v1103 = vpack.c.b16 %v1091, %v1090
      %v1104 = vpack.c.b16 %v1093, %v1092
      %v1105 = vpack.c.b16 %v1095, %v1094
      %v1106 = vpack.c.b16 %v1097, %v1096
      %v1107 = vpack.c.b16 %v1099, %v1098
      %1116 = vmatprep.subr.bf16.mxu0 0
      %1117 = vmatpush1.bf16.msra.mxu0 %v1107
      %1118 = vmatprep.subr.bf16.mxu0 0
      %1119 = vmatpush1.bf16.msra.mxu0 %v1106
      %1120 = vmatprep.subr.bf16.mxu0 0
      %1121 = vmatpush1.bf16.msra.mxu0 %v1105
      %1122 = vmatprep.subr.bf16.mxu0 0
      %1123 = vmatpush1.bf16.msra.mxu0 %v1104
      %1124 = vmatprep.subr.bf16.mxu0 0
      %1125 = vmatpush1.bf16.msra.mxu0 %v1103
      %1126 = vmatprep.subr.bf16.mxu0 0
      %1127 = vmatpush1.bf16.msra.mxu0 %v1102
      %1128 = vmatprep.subr.bf16.mxu0 0
      %1129 = vmatpush1.bf16.msra.mxu0 %v1101
      %1130 = vmatprep.subr.bf16.mxu0 0
      %1131 = vmatpush1.bf16.msra.mxu0 %v1100
      %1132 = vmatprep.subr.bf16.mxu0 0
      %1133 = vmatpush2.bf16.msra.mxu0 0
      %1134 = vmatprep.subr.bf16.mxu0 0
      %1135 = vmatpush2.bf16.msra.mxu0 0
      %1136 = vmatprep.subr.bf16.mxu0 0
      %1137 = vmatpush2.bf16.msra.mxu0 0
      %1138 = vmatprep.subr.bf16.mxu0 0
      %1139 = vmatpush2.bf16.msra.mxu0 0
      %1140 = vmatprep.subr.bf16.mxu0 0
      %1141 = vmatpush2.bf16.msra.mxu0 0
      %1142 = vmatprep.subr.bf16.mxu0 0
      %1143 = vmatpush2.bf16.msra.mxu0 0
      %1144 = vmatprep.subr.bf16.mxu0 0
      %1145 = vmatpush2.bf16.msra.mxu0 0
      %1146 = vmatprep.subr.bf16.mxu0 0
      %1147 = vmatpush2.bf16.msra.mxu0 0
      %1148 = vmatprep.mubr.bf16.mxu0 0
      %1149 = vmatmul.mubr.bf16.gmra.mxu0 %v1043
      %v1150 = vpop.f32.mrf.mxu0
      %v1151 = vadd.f32 %v1066, %v1150
      %v1152 = vpop.f32.mrf.mxu0
      %v1153 = vpop.f32.mrf.mxu0
      %v1154 = vadd.f32 %v1066, %v1153
      %v1155 = vpop.f32.mrf.mxu0
      %1156 = vmatprep.mubr.bf16.mxu0 0
      %1157 = vmatmul.mubr.bf16.gmra.mxu0 %v1044
      %v1158 = vpop.f32.mrf.mxu0
      %v1159 = vadd.f32 %v1066, %v1158
      %v1160 = vpop.f32.mrf.mxu0
      %v1161 = vpop.f32.mrf.mxu0
      %v1162 = vadd.f32 %v1066, %v1161
      %v1163 = vpop.f32.mrf.mxu0
      %1164 = vdwg.mxu0
      %1165 = vst [vmem:[%s381] sm:$0xff] %v1151
      %1166 = vst [vmem:[%s381 + $0x8] sm:$0xff] %v1154
      %1167 = vst [vmem:[%s381 + $0x10] sm:$0xff] %v1159
      %1168 = vst [vmem:[%s381 + $0x18] sm:$0xff] %v1162
      %v1169 = vlaneseq
      %v1170 = vand.u32 %v1169, 127
      %vm1171 = vcmp.lt.s32.totalorder %v1170, 20
      %v1172 = vsel %vm1171, %v1151, -1e+30
      %v1173 = vsel %vm1171, %v1154, -1e+30
      %v1174 = vsel %vm1171, %v1159, -1e+30
      %v1175 = vsel %vm1171, %v1162, -1e+30
      %1176 = vmax.xlane.f32.xlu0 %v1172
      %v1177 = vpop.xlane.xlu0 %1176
      %1178 = vmax.xlane.f32.xlu0 %v1173
      %v1179 = vpop.xlane.xlu0 %1178
      %1180 = vmax.xlane.f32.xlu0 %v1174
      %v1181 = vpop.xlane.xlu0 %1180
      %1182 = vmax.xlane.f32.xlu0 %v1175
      %v1183 = vpop.xlane.xlu0 %1182
      %v1184 = vsub.f32 %v1172, %v1177
      %v1185 = vsub.f32 %v1173, %v1179
      %v1186 = vsub.f32 %v1174, %v1181
      %v1187 = vsub.f32 %v1175, %v1183
      %v1188 = vmul.f32 %v1184, 1.442695
      %v1189 = vpow.pop %v1188
      %v1190 = vmul.f32 %v1185, 1.442695
      %v1191 = vpow.pop %v1190
      %v1192 = vmul.f32 %v1186, 1.442695
      %v1193 = vpow.pop %v1192
      %v1194 = vmul.f32 %v1187, 1.442695
      %v1195 = vpow.pop %v1194
      %1196 = vadd.xlane.f32.xlu0 %v1189
      %v1197 = vpop.xlane.xlu0 %1196
      %1198 = vadd.xlane.f32.xlu0 %v1191
      %v1199 = vpop.xlane.xlu0 %1198
      %1200 = vadd.xlane.f32.xlu0 %v1193
      %v1201 = vpop.xlane.xlu0 %1200
      %1202 = vadd.xlane.f32.xlu0 %v1195
      %v1203 = vpop.xlane.xlu0 %1202
      %v1204 = vrcp.pop %v1197
      %v1205 = vmul.f32 %v1189, %v1204
      %v1206 = vrcp.pop %v1199
      %v1207 = vmul.f32 %v1191, %v1206
      %v1208 = vrcp.pop %v1201
      %v1209 = vmul.f32 %v1193, %v1208
      %v1210 = vrcp.pop %v1203
      %v1211 = vmul.f32 %v1195, %v1210
      %1212 = vst [vmem:[%s386] sm:$0xff] %v1205
      %1213 = vst [vmem:[%s386 + $0x8] sm:$0xff] %v1207
      %1214 = vst [vmem:[%s386 + $0x10] sm:$0xff] %v1209
      %1215 = vst [vmem:[%s386 + $0x18] sm:$0xff] %v1211
      %p1216 = scmp.lt.s32.totalorder %s22, 1
      %s1217 = scalar_select %p1216, %s22, 1
      %s1218 = smul.addr %s1217, 4
      %s1219 = smul.addr %s1218, 8
      %s1220 = scalar_lea.vmem %s7, %s1219
      %p1221 = scmp.lt.s32.totalorder %s22, 1
      %s1222 = scalar_select %p1221, %s22, 1
      %s1223 = smul.addr %s1222, 4
      %s1224 = smul.addr %s1223, 8
      %s1225 = scalar_lea.vmem %s8, %s1224
      %p1226 = scmp.lt.s32.totalorder %s22, 1
      %s1227 = scalar_select %p1226, %s22, 1
      %s1228 = smul.addr %s1227, 4
      %s1229 = smul.addr %s1228, 8
      %s1230 = scalar_lea.vmem %s9, %s1229
      %p1231 = scmp.lt.s32.totalorder %s22, 1
      %s1232 = scalar_select %p1231, %s22, 1
      %s1233 = smul.addr %s1232, 4
      %s1234 = smul.addr %s1233, 8
      %s1235 = scalar_lea.vmem %s10, %s1234
      // Predicated region
      $region49: #{spatiotemporal_causal_forward.1} parent=47 // pred_check
        %p1236 = pneg %p192
      $region50: #{spatiotemporal_causal_forward.1} parent=47 // pred_check_branch
        %1238 = sbr.rel (%p1236) target = $region52
      $region51: #{spatiotemporal_causal_forward.1} parent=47 // pred_region
        _
      $region52: #{spatiotemporal_causal_forward.1} parent=47 // pred_fallthru
        _
      // Predicated region
      $region53: #{spatiotemporal_causal_forward.1} parent=47 // pred_check
        %p1239 = pneg %p218
      $region54: #{spatiotemporal_causal_forward.1} parent=47 // pred_check_branch
        %1241 = sbr.rel (%p1239) target = $region56
      $region55: #{spatiotemporal_causal_forward.1} parent=47 // pred_region
        _
      $region56: #{spatiotemporal_causal_forward.1} parent=47 // pred_fallthru
        _
      // Predicated region
      $region57: #{spatiotemporal_causal_forward.1} parent=47 // pred_check
        %p1242 = pneg %p244
      $region58: #{spatiotemporal_causal_forward.1} parent=47 // pred_check_branch
        %1244 = sbr.rel (%p1242) target = $region60
      $region59: #{spatiotemporal_causal_forward.1} parent=47 // pred_region
        _
      $region60: #{spatiotemporal_causal_forward.1} parent=47 // pred_fallthru
        _
      // Predicated region
      $region61: #{spatiotemporal_causal_forward.1} parent=47 // pred_check
        %p1245 = pneg %p270
      $region62: #{spatiotemporal_causal_forward.1} parent=47 // pred_check_branch
        %1247 = sbr.rel (%p1245) target = $region64
      $region63: #{spatiotemporal_causal_forward.1} parent=47 // pred_region
        _
      $region64: #{spatiotemporal_causal_forward.1} parent=47 // pred_fallthru
        _
    $region48: #{spatiotemporal_causal_forward.1} parent=5 // pred_fallthru
      _
    %p1248 = scmp.le.s32.totalorder 2, %s17
    // Predicated region
    $region65: #{spatiotemporal_causal_forward.1} parent=5 // pred_check
      %p1249 = pneg %p1248
    $region66: #{spatiotemporal_causal_forward.1} parent=5 // pred_check_branch
      %1251 = sbr.rel (%p1249) target = $region68
    $region67: #{spatiotemporal_causal_forward.1} parent=5 // pred_region
      %s1252 = ssub.s32 %s17, 2
      // Predicated region
      $region69: #{spatiotemporal_causal_forward.1} parent=67 // pred_check
        %p1253 = pneg %p198
      $region70: #{spatiotemporal_causal_forward.1} parent=67 // pred_check_branch
        %1255 = sbr.rel (%p1253) target = $region72
      $region71: #{spatiotemporal_causal_forward.1} parent=67 // pred_region
        %p1256 = scmp.lt.s32.totalorder %s23, 1
        %s1257 = scalar_select %p1256, %s23, 1
        %s1258 = smul.addr %s1257, 4
        %s1259 = smul.addr %s1258, 8
        %s1260 = scalar_lea.vmem %s7, %s1259
      $region72: #{spatiotemporal_causal_forward.1} parent=67 // pred_fallthru
        _
      // Predicated region
      $region73: #{spatiotemporal_causal_forward.1} parent=67 // pred_check
        %p1261 = pneg %p224
      $region74: #{spatiotemporal_causal_forward.1} parent=67 // pred_check_branch
        %1263 = sbr.rel (%p1261) target = $region76
      $region75: #{spatiotemporal_causal_forward.1} parent=67 // pred_region
        %p1264 = scmp.lt.s32.totalorder %s23, 1
        %s1265 = scalar_select %p1264, %s23, 1
        %s1266 = smul.addr %s1265, 4
        %s1267 = smul.addr %s1266, 8
        %s1268 = scalar_lea.vmem %s8, %s1267
      $region76: #{spatiotemporal_causal_forward.1} parent=67 // pred_fallthru
        _
      // Predicated region
      $region77: #{spatiotemporal_causal_forward.1} parent=67 // pred_check
        %p1269 = pneg %p250
      $region78: #{spatiotemporal_causal_forward.1} parent=67 // pred_check_branch
        %1271 = sbr.rel (%p1269) target = $region80
      $region79: #{spatiotemporal_causal_forward.1} parent=67 // pred_region
        %p1272 = scmp.lt.s32.totalorder %s23, 1
        %s1273 = scalar_select %p1272, %s23, 1
        %s1274 = smul.addr %s1273, 4
        %s1275 = smul.addr %s1274, 8
        %s1276 = scalar_lea.vmem %s9, %s1275
      $region80: #{spatiotemporal_causal_forward.1} parent=67 // pred_fallthru
        _
      // Predicated region
      $region81: #{spatiotemporal_causal_forward.1} parent=67 // pred_check
        %p1277 = pneg %p276
      $region82: #{spatiotemporal_causal_forward.1} parent=67 // pred_check_branch
        %1279 = sbr.rel (%p1277) target = $region84
      $region83: #{spatiotemporal_causal_forward.1} parent=67 // pred_region
        %p1280 = scmp.lt.s32.totalorder %s23, 1
        %s1281 = scalar_select %p1280, %s23, 1
        %s1282 = smul.addr %s1281, 4
        %s1283 = smul.addr %s1282, 8
        %s1284 = scalar_lea.vmem %s10, %s1283
      $region84: #{spatiotemporal_causal_forward.1} parent=67 // pred_fallthru
        _
    $region68: #{spatiotemporal_causal_forward.1} parent=5 // pred_fallthru
      _
  $region6: #{spatiotemporal_causal_forward.1} parent=0 // loop_footer
    %s21 = sadd.s32 1, %s17
  $region7: #{spatiotemporal_causal_forward.1} parent=0 // loop_footer_branch
    %16 = sbr.rel target = $region3
  $region8: #{spatiotemporal_causal_forward.1} parent=0 // loop_exit
    _

</llo_original>
